<compile_context>
chip_gen: v6e
topology: v6e:2x2x1
jax: 0.10.0
libtpu: 0.0.40
codegen_flags: <defaults>
</compile_context>

<pallas_src>
import functools
import math

import jax
import jax.numpy as jnp
from jax.experimental import pallas as pl
from jax.experimental.pallas import tpu as pltpu


# ------------------------------------------------------------------ fused forward kernel
def _fused_forward_kernel(
        x_ref, w_init_ref,
        wqkv_ref, bqkv_ref, wo_ref, bo_ref, w1_ref, b1_ref,
        g1_ref, be1_ref, g2_ref, be2_ref,
        w_lin_ref, b_lin_ref, w_fin_ref, b_fin_ref,
        o_ref,
        y_ref,                              # persistent VMEM scratch: (B*S, D) f32
        *, heads, batch, seq, n_linears):
    l = pl.program_id(0)
    n_layers = pl.num_programs(0)
    bf16 = jnp.bfloat16

    D = y_ref.shape[-1]
    hd = D // heads
    inv_d = 1.0 / D

    def layer_norm(z, gamma, beta):
        # one-pass stats in f32, variance clamped at 0
        mu = jnp.sum(z, axis=-1, keepdims=True) * inv_d
        ex2 = jnp.sum(z * z, axis=-1, keepdims=True) * inv_d
        var = jnp.maximum(ex2 - mu * mu, 0.0)
        return (z - mu) * jax.lax.rsqrt(var + 1e-5) * gamma + beta

    # ---- layer 0: initial Linear (no bias): (B*S, E) @ (E, D)
    @pl.when(l == 0)
    def _():
        y_ref[...] = jnp.dot(x_ref[...].astype(bf16), w_init_ref[...],
                             preferred_element_type=jnp.float32)

    y = y_ref[...]                                                      # (B*S, D) f32

    # ---- fused QKV projection over the whole slab (bf16 operands, f32 accum)
    qkv = jnp.dot(y.astype(bf16), wqkv_ref[...],
                  preferred_element_type=jnp.float32) + bqkv_ref[...]   # (B*S, 3D) f32
    qkv_b = qkv.astype(bf16).reshape(batch, seq, 3 * D)                 # (B, S, 3D)

    # ---- multi-head self-attention: batched over B per head, single Wo matmul
    head_outs = []
    for h in range(heads):                                              # tiny static unroll
        qh = qkv_b[:, :, h * hd:(h + 1) * hd]                           # (B, S, hd) bf16
        kh = qkv_b[:, :, D + h * hd:D + (h + 1) * hd]
        vh = qkv_b[:, :, 2 * D + h * hd:2 * D + (h + 1) * hd]
        s = jnp.einsum('bqd,bkd->bqk', qh, kh,
                       preferred_element_type=jnp.float32)              # (B, S, S) f32
        s = s - jnp.max(s, axis=-1, keepdims=True)
        p = jnp.exp(s)
        p = p * pl.reciprocal(jnp.sum(p, axis=-1, keepdims=True), approx=True)
        head_outs.append(jnp.einsum('bqk,bkd->bqd', p.astype(bf16), vh,
                                    preferred_element_type=jnp.float32))  # (B, S, hd)
    o = jnp.concatenate(head_outs, axis=-1).reshape(batch * seq, D)     # head-major (B*S, D)

    attn = jnp.dot(o.astype(bf16), wo_ref[...],
                   preferred_element_type=jnp.float32) + bo_ref[...]

    # ---- residual + LayerNorm
    z = layer_norm(y + attn, g1_ref[...], be1_ref[...])

    # ---- FFN (D -> D, ReLU) + residual + LayerNorm
    f = jnp.maximum(jnp.dot(z.astype(bf16), w1_ref[...],
                            preferred_element_type=jnp.float32) + b1_ref[...], 0.0)
    y_new = layer_norm(z + f, g2_ref[...], be2_ref[...])
    y_ref[...] = y_new

    # ---- last layer: pool over sequence + classifier head
    @pl.when(l == n_layers - 1)
    def _():
        # permute(0,2,1) + AdaptiveMaxPool1d(1) + Flatten == max over the sequence axis
        pooled = jnp.max(y_new.reshape(batch, seq, D), axis=1)          # (B, D) f32
        h = pooled
        for i in range(n_linears):                                       # Linear(D,D)+ReLU stack
            h = jnp.maximum(jnp.dot(h.astype(bf16), w_lin_ref[i],
                                    preferred_element_type=jnp.float32) + b_lin_ref[i], 0.0)
        o_ref[...] = (jnp.dot(h.astype(bf16), w_fin_ref[...],
                              preferred_element_type=jnp.float32) + b_fin_ref[...])


# ------------------------------------------------------------------ parameter packing
def pack_params(params, heads):
    """Fold the attention scale into Wq/bq, cast matmul weights to bf16, stack per layer."""
    D = params["w_init"].shape[1]
    assert D % heads == 0, "dim must be divisible by heads"
    hd = D // heads
    scale = 1.0 / math.sqrt(hd)
    bf16 = jnp.bfloat16

    wqkv, bqkv, wo, bo, w1, b1, g1, be1, g2, be2 = ([] for _ in range(10))
    for blk in params["tblocks"]:
        wqkv.append(jnp.concatenate([blk["wq"] * scale, blk["wk"], blk["wv"]], axis=1))
        bqkv.append(jnp.concatenate([blk["bq"] * scale, blk["bk"], blk["bv"]], axis=1))
        wo.append(blk["wo"]); bo.append(blk["bo"])
        w1.append(blk["w1"]); b1.append(blk["b1"])
        g1.append(blk["g1"]); be1.append(blk["be1"])
        g2.append(blk["g2"]); be2.append(blk["be2"])

    w_lin = jnp.stack([w for (w, _) in params["lin"]]).astype(bf16)   # (NL, D, D)
    b_lin = jnp.stack([b for (_, b) in params["lin"]])                # (NL, 1, D) f32

    return {
        "w_init": params["w_init"].astype(bf16),
        "wqkv": jnp.stack(wqkv).astype(bf16),   # (L, D, 3D)
        "bqkv": jnp.stack(bqkv),                # (L, 1, 3D) f32
        "wo": jnp.stack(wo).astype(bf16),       # (L, D, D)
        "bo": jnp.stack(bo),                    # (L, 1, D) f32
        "w1": jnp.stack(w1).astype(bf16),       # (L, D, D)
        "b1": jnp.stack(b1),                    # (L, 1, D) f32
        "g1": jnp.stack(g1), "be1": jnp.stack(be1),
        "g2": jnp.stack(g2), "be2": jnp.stack(be2),
        "w_lin": w_lin, "b_lin": b_lin,
        "w_fin": params["w_fin"].astype(bf16),  # (D, C)
        "b_fin": params["b_fin"],               # (1, C) f32
    }


# ------------------------------------------------------------------ pallas_call wrapper
def suicide_classifier_forward(x_embed, packed, heads):
    """x_embed: (B, S, E) float32 pre-computed token embeddings."""
    B, S, E = x_embed.shape
    D = packed["w_init"].shape[1]
    C = packed["w_fin"].shape[1]
    L = packed["wqkv"].shape[0]
    NL = packed["w_lin"].shape[0]
    assert D % heads == 0

    kernel = functools.partial(_fused_forward_kernel,
                               heads=heads, batch=B, seq=S, n_linears=NL)

    def whole(shape):                      # resident whole-array block
        return pl.BlockSpec(shape, lambda l, _n=len(shape): (0,) * _n)

    def per_layer(shape):                  # leading layer axis streamed per grid step
        return pl.BlockSpec((None,) + shape,
                            lambda l, _n=len(shape): (l,) + (0,) * _n)

    return pl.pallas_call(
        kernel,
        out_shape=jax.ShapeDtypeStruct((B, C), jnp.float32),
        grid=(L,),
        in_specs=[
            whole((B * S, E)),              # x
            whole((E, D)),                  # w_init
            per_layer((D, 3 * D)),          # wqkv (bf16, Wq pre-scaled)
            per_layer((1, 3 * D)),          # bqkv (f32, bq pre-scaled)
            per_layer((D, D)),              # wo
            per_layer((1, D)),              # bo
            per_layer((D, D)),              # w1
            per_layer((1, D)),              # b1
            per_layer((1, D)),              # g1
            per_layer((1, D)),              # be1
            per_layer((1, D)),              # g2
            per_layer((1, D)),              # be2
            whole((NL, D, D)),              # w_lin stack
            whole((NL, 1, D)),              # b_lin stack
            whole((D, C)),                  # w_fin
            whole((1, C)),                  # b_fin
        ],
        out_specs=pl.BlockSpec((B, C), lambda l: (0, 0)),   # resident; written at last layer
        scratch_shapes=[pltpu.VMEM((B * S, D), jnp.float32)],
        compiler_params=pltpu.CompilerParams(
            dimension_semantics=("arbitrary",),
            vmem_limit_bytes=32 * 1024 * 1024,
        ),
    )(x_embed.reshape(B * S, E), packed["w_init"],
      packed["wqkv"], packed["bqkv"], packed["wo"], packed["bo"],
      packed["w1"], packed["b1"], packed["g1"], packed["be1"],
      packed["g2"], packed["be2"],
      packed["w_lin"], packed["b_lin"], packed["w_fin"], packed["b_fin"])


# ------------------------------------------------------------------ parameters
def init_params(key, embed_dim, dim, classes, n_transformers, n_linears):
    keys = iter(jax.random.split(key, 256))

    def nrm(shape, scale=0.05):
        return (scale * jax.random.normal(next(keys), shape)).astype(jnp.float32)

    params = {"w_init": nrm((embed_dim, dim)), "tblocks": [], "lin": []}
    for _ in range(n_transformers):
        blk = {
            "wq": nrm((dim, dim)), "wk": nrm((dim, dim)), "wv": nrm((dim, dim)),
            "bq": nrm((1, dim)), "bk": nrm((1, dim)), "bv": nrm((1, dim)),
            "wo": nrm((dim, dim)), "bo": nrm((1, dim)),
            "g1": jnp.ones((1, dim), jnp.float32), "be1": jnp.zeros((1, dim), jnp.float32),
            "w1": nrm((dim, dim)), "b1": nrm((1, dim)),
            "g2": jnp.ones((1, dim), jnp.float32), "be2": jnp.zeros((1, dim), jnp.float32),
        }
        params["tblocks"].append(blk)
    for _ in range(n_linears):
        params["lin"].append((nrm((dim, dim)), nrm((1, dim))))
    params["w_fin"] = nrm((dim, classes))
    params["b_fin"] = nrm((1, classes))
    return params


# ------------------------------------------------------------------ pure-JAX reference
def reference_forward(x_embed, params, heads):
    hp = jax.lax.Precision.HIGHEST
    y = jnp.dot(x_embed, params["w_init"], precision=hp)
    for blk in params["tblocks"]:
        B, S, D = y.shape
        hd = D // heads
        q = jnp.dot(y, blk["wq"], precision=hp) + blk["bq"]
        k = jnp.dot(y, blk["wk"], precision=hp) + blk["bk"]
        v = jnp.dot(y, blk["wv"], precision=hp) + blk["bv"]
        qh = q.reshape(B, S, heads, hd); kh = k.reshape(B, S, heads, hd)
        vh = v.reshape(B, S, heads, hd)
        s = jnp.einsum("bshd,bthd->bhst", qh, kh, precision=hp) / math.sqrt(hd)
        p = jax.nn.softmax(s, axis=-1)
        o = jnp.einsum("bhst,bthd->bshd", p, vh, precision=hp).reshape(B, S, D)
        o = jnp.dot(o, blk["wo"], precision=hp) + blk["bo"]
        z = y + o
        mu = jnp.mean(z, -1, keepdims=True); var = jnp.mean((z - mu) ** 2, -1, keepdims=True)
        z = (z - mu) * jax.lax.rsqrt(var + 1e-5) * blk["g1"] + blk["be1"]
        f = jnp.maximum(jnp.dot(z, blk["w1"], precision=hp) + blk["b1"], 0.0)
        w = z + f
        mu = jnp.mean(w, -1, keepdims=True); var = jnp.mean((w - mu) ** 2, -1, keepdims=True)
        y = (w - mu) * jax.lax.rsqrt(var + 1e-5) * blk["g2"] + blk["be2"]
    pooled = jnp.max(y, axis=1)
    for (w_lin, b_lin) in params["lin"]:
        pooled = jnp.maximum(jnp.dot(pooled, w_lin, precision=hp) + b_lin, 0.0)
    return jnp.dot(pooled, params["w_fin"], precision=hp) + params["b_fin"]


# ------------------------------------------------------------------ main
if __name__ == "__main__":
    B, S, E, D, H, C = 2, 8, 32, 32, 2, 3      # batch, seq, embed_dim, dim, heads, classes
    key = jax.random.PRNGKey(0)
    k_x, k_p = jax.random.split(key)

    x_embed = jax.random.normal(k_x, (B, S, E), dtype=jnp.float32)   # "embedder" output
    params = init_params(k_p, E, D, C, n_transformers=2, n_linears=1)
    packed = pack_params(params, heads=H)

    logits = suicide_classifier_forward(x_embed, packed, heads=H)
    logits = jax.block_until_ready(logits)

    ref = reference_forward(x_embed, params, heads=H)
    assert logits.shape == (B, C)
    assert jnp.allclose(logits, ref, rtol=2e-2, atol=2e-2), "Pallas output mismatch vs JAX reference"

    print("KERNEL_OK")
</pallas_src>

<mosaic_0001>
module attributes {stable_mosaic.version = 11 : i64} {
  func.func @_fused_forward_kernel(%arg0: i32, %arg1: memref<16x32xf32, #tpu.memory_space<vmem>>, %arg2: memref<32x32xbf16, #tpu.memory_space<vmem>>, %arg3: memref<1x32x96xbf16, #tpu.memory_space<vmem>>, %arg4: memref<1x1x96xf32, #tpu.memory_space<vmem>>, %arg5: memref<1x32x32xbf16, #tpu.memory_space<vmem>>, %arg6: memref<1x1x32xf32, #tpu.memory_space<vmem>>, %arg7: memref<1x32x32xbf16, #tpu.memory_space<vmem>>, %arg8: memref<1x1x32xf32, #tpu.memory_space<vmem>>, %arg9: memref<1x1x32xf32, #tpu.memory_space<vmem>>, %arg10: memref<1x1x32xf32, #tpu.memory_space<vmem>>, %arg11: memref<1x1x32xf32, #tpu.memory_space<vmem>>, %arg12: memref<1x1x32xf32, #tpu.memory_space<vmem>>, %arg13: memref<1x32x32xbf16, #tpu.memory_space<vmem>>, %arg14: memref<1x1x32xf32, #tpu.memory_space<vmem>>, %arg15: memref<32x3xbf16, #tpu.memory_space<vmem>>, %arg16: memref<1x3xf32, #tpu.memory_space<vmem>>, %arg17: memref<2x3xf32, #tpu.memory_space<vmem>>, %arg18: memref<16x32xf32, #tpu.memory_space<vmem>>) attributes {dimension_semantics = [#tpu.dimension_semantics<arbitrary>], iteration_bounds = array<i64: 2>, scalar_prefetch = 0 : i64, scratch_operands = 1 : i64, tpu.core_type = #tpu.core_type<tc>, window_params = [{pipeline_mode = #tpu.pipeline_mode<synchronous>, transform_indices = @transform_0, window_bounds = array<i64: 16, 32>}, {pipeline_mode = #tpu.pipeline_mode<synchronous>, transform_indices = @transform_1, window_bounds = array<i64: 32, 32>}, {transform_indices = @transform_2, window_bounds = array<i64: 1, 32, 96>}, {transform_indices = @transform_3, window_bounds = array<i64: 1, 1, 96>}, {transform_indices = @transform_4, window_bounds = array<i64: 1, 32, 32>}, {transform_indices = @transform_5, window_bounds = array<i64: 1, 1, 32>}, {transform_indices = @transform_6, window_bounds = array<i64: 1, 32, 32>}, {transform_indices = @transform_7, window_bounds = array<i64: 1, 1, 32>}, {transform_indices = @transform_8, window_bounds = array<i64: 1, 1, 32>}, {transform_indices = @transform_9, window_bounds = array<i64: 1, 1, 32>}, {transform_indices = @transform_10, window_bounds = array<i64: 1, 1, 32>}, {transform_indices = @transform_11, window_bounds = array<i64: 1, 1, 32>}, {pipeline_mode = #tpu.pipeline_mode<synchronous>, transform_indices = @transform_12, window_bounds = array<i64: 1, 32, 32>}, {pipeline_mode = #tpu.pipeline_mode<synchronous>, transform_indices = @transform_13, window_bounds = array<i64: 1, 1, 32>}, {pipeline_mode = #tpu.pipeline_mode<synchronous>, transform_indices = @transform_14, window_bounds = array<i64: 32, 3>}, {pipeline_mode = #tpu.pipeline_mode<synchronous>, transform_indices = @transform_15, window_bounds = array<i64: 1, 3>}, {pipeline_mode = #tpu.pipeline_mode<synchronous>, transform_indices = @transform_16, window_bounds = array<i64: 2, 3>}]} {
    %c0_i32 = arith.constant 0 : i32
    %0 = arith.cmpi eq, %arg0, %c0_i32 : i32
    %1 = arith.extui %0 : i1 to i32
    %c0_i32_0 = arith.constant 0 : i32
    %2 = arith.cmpi ne, %1, %c0_i32_0 : i32
    scf.if %2 {
      %c0_58 = arith.constant 0 : index
      %c0_59 = arith.constant 0 : index
      %128 = vector.load %arg1[%c0_58, %c0_59] : memref<16x32xf32, #tpu.memory_space<vmem>>, vector<16x32xf32>
      %129 = arith.truncf %128 : vector<16x32xf32> to vector<16x32xbf16>
      %c0_60 = arith.constant 0 : index
      %c0_61 = arith.constant 0 : index
      %130 = vector.load %arg2[%c0_60, %c0_61] : memref<32x32xbf16, #tpu.memory_space<vmem>>, vector<32x32xbf16>
      %cst_62 = arith.constant dense<0.000000e+00> : vector<16x32xf32>
      %131 = tpu.matmul %129, %130, %cst_62 {dimension_numbers = #tpu.dot_dimension_numbers<[1], [0], [0], [1], [0, 0, 1, 1], [], []>} : vector<16x32xbf16>, vector<32x32xbf16>, vector<16x32xf32> -> vector<16x32xf32>
      %c0_63 = arith.constant 0 : index
      %c0_64 = arith.constant 0 : index
      %132 = vector.load %arg18[%c0_63, %c0_64] : memref<16x32xf32, #tpu.memory_space<vmem>>, vector<16x32xf32>
      tpu.vector_store %arg18[%c0_63, %c0_64], %131 {strides = array<i32>} : memref<16x32xf32, #tpu.memory_space<vmem>>, vector<16x32xf32>,
    } else {
    }
    %c0 = arith.constant 0 : index
    %c0_1 = arith.constant 0 : index
    %3 = vector.load %arg18[%c0, %c0_1] : memref<16x32xf32, #tpu.memory_space<vmem>>, vector<16x32xf32>
    %4 = arith.truncf %3 : vector<16x32xf32> to vector<16x32xbf16>
    %c0_2 = arith.constant 0 : index
    %c0_3 = arith.constant 0 : index
    %c0_4 = arith.constant 0 : index
    %5 = vector.load %arg3[%c0_2, %c0_3, %c0_4] : memref<1x32x96xbf16, #tpu.memory_space<vmem>>, vector<1x32x96xbf16>
    %6 = vector.shape_cast %5 : vector<1x32x96xbf16> to vector<32x96xbf16>
    %cst = arith.constant dense<0.000000e+00> : vector<16x96xf32>
    %7 = tpu.matmul %4, %6, %cst {dimension_numbers = #tpu.dot_dimension_numbers<[1], [0], [0], [1], [0, 0, 1, 1], [], []>} : vector<16x32xbf16>, vector<32x96xbf16>, vector<16x96xf32> -> vector<16x96xf32>
    %c0_5 = arith.constant 0 : index
    %c0_6 = arith.constant 0 : index
    %c0_7 = arith.constant 0 : index
    %8 = vector.load %arg4[%c0_5, %c0_6, %c0_7] : memref<1x1x96xf32, #tpu.memory_space<vmem>>, vector<1x1x96xf32>
    %9 = vector.shape_cast %8 : vector<1x1x96xf32> to vector<1x96xf32>
    %10 = vector.broadcast %9 : vector<1x96xf32> to vector<16x96xf32>
    %11 = arith.addf %7, %10 : vector<16x96xf32>
    %12 = arith.truncf %11 : vector<16x96xf32> to vector<16x96xbf16>
    %13 = vector.shape_cast %12 : vector<16x96xbf16> to vector<2x8x96xbf16>
    %14 = vector.extract_strided_slice %13 {offsets = [0, 0, 0], sizes = [2, 8, 16], strides = [1, 1, 1]} : vector<2x8x96xbf16> to vector<2x8x16xbf16>
    %15 = vector.extract_strided_slice %13 {offsets = [0, 0, 32], sizes = [2, 8, 16], strides = [1, 1, 1]} : vector<2x8x96xbf16> to vector<2x8x16xbf16>
    %16 = vector.extract_strided_slice %13 {offsets = [0, 0, 64], sizes = [2, 8, 16], strides = [1, 1, 1]} : vector<2x8x96xbf16> to vector<2x8x16xbf16>
    "tpu.trace_start"() <{level = 10 : i32, message = "bqd,bkd->bqk"}> : () -> ()
    %cst_8 = arith.constant dense<0.000000e+00> : vector<2x8x8xf32>
    %17 = tpu.matmul %14, %15, %cst_8 {dimension_numbers = #tpu.dot_dimension_numbers<[2], [2], [1], [1], [0, 0, 0, 1, 1, 1], [0], [0]>} : vector<2x8x16xbf16>, vector<2x8x16xbf16>, vector<2x8x8xf32> -> vector<2x8x8xf32>
    "tpu.trace_stop"() : () -> ()
    %cst_9 = arith.constant dense<0xFF800000> : vector<2x8xf32>
    %18 = vector.multi_reduction <maximumf>, %17, %cst_9 [2] : vector<2x8x8xf32> to vector<2x8xf32>
    %19 = vector.shape_cast %18 : vector<2x8xf32> to vector<2x8x1xf32>
    %20 = vector.broadcast %19 : vector<2x8x1xf32> to vector<2x8x8xf32>
    %21 = arith.subf %17, %20 : vector<2x8x8xf32>
    %22 = math.exp %21 : vector<2x8x8xf32>
    %cst_10 = arith.constant dense<0.000000e+00> : vector<2x8xf32>
    %23 = vector.multi_reduction <add>, %22, %cst_10 [2] : vector<2x8x8xf32> to vector<2x8xf32>
    %24 = vector.shape_cast %23 : vector<2x8xf32> to vector<2x8x1xf32>
    %25 = tpu.reciprocal %24 {approx = true} : vector<2x8x1xf32> -> vector<2x8x1xf32>
    %26 = vector.broadcast %25 : vector<2x8x1xf32> to vector<2x8x8xf32>
    %27 = arith.mulf %22, %26 : vector<2x8x8xf32>
    %28 = arith.truncf %27 : vector<2x8x8xf32> to vector<2x8x8xbf16>
    "tpu.trace_start"() <{level = 10 : i32, message = "bqk,bkd->bqd"}> : () -> ()
    %cst_11 = arith.constant dense<0.000000e+00> : vector<2x8x16xf32>
    %29 = tpu.matmul %28, %16, %cst_11 {dimension_numbers = #tpu.dot_dimension_numbers<[2], [1], [1], [2], [0, 0, 0, 1, 1, 2], [0], [0]>} : vector<2x8x8xbf16>, vector<2x8x16xbf16>, vector<2x8x16xf32> -> vector<2x8x16xf32>
    "tpu.trace_stop"() : () -> ()
    %30 = vector.extract_strided_slice %13 {offsets = [0, 0, 16], sizes = [2, 8, 16], strides = [1, 1, 1]} : vector<2x8x96xbf16> to vector<2x8x16xbf16>
    %31 = vector.extract_strided_slice %13 {offsets = [0, 0, 48], sizes = [2, 8, 16], strides = [1, 1, 1]} : vector<2x8x96xbf16> to vector<2x8x16xbf16>
    %32 = vector.extract_strided_slice %13 {offsets = [0, 0, 80], sizes = [2, 8, 16], strides = [1, 1, 1]} : vector<2x8x96xbf16> to vector<2x8x16xbf16>
    "tpu.trace_start"() <{level = 10 : i32, message = "bqd,bkd->bqk"}> : () -> ()
    %cst_12 = arith.constant dense<0.000000e+00> : vector<2x8x8xf32>
    %33 = tpu.matmul %30, %31, %cst_12 {dimension_numbers = #tpu.dot_dimension_numbers<[2], [2], [1], [1], [0, 0, 0, 1, 1, 1], [0], [0]>} : vector<2x8x16xbf16>, vector<2x8x16xbf16>, vector<2x8x8xf32> -> vector<2x8x8xf32>
    "tpu.trace_stop"() : () -> ()
    %cst_13 = arith.constant dense<0xFF800000> : vector<2x8xf32>
    %34 = vector.multi_reduction <maximumf>, %33, %cst_13 [2] : vector<2x8x8xf32> to vector<2x8xf32>
    %35 = vector.shape_cast %34 : vector<2x8xf32> to vector<2x8x1xf32>
    %36 = vector.broadcast %35 : vector<2x8x1xf32> to vector<2x8x8xf32>
    %37 = arith.subf %33, %36 : vector<2x8x8xf32>
    %38 = math.exp %37 : vector<2x8x8xf32>
    %cst_14 = arith.constant dense<0.000000e+00> : vector<2x8xf32>
    %39 = vector.multi_reduction <add>, %38, %cst_14 [2] : vector<2x8x8xf32> to vector<2x8xf32>
    %40 = vector.shape_cast %39 : vector<2x8xf32> to vector<2x8x1xf32>
    %41 = tpu.reciprocal %40 {approx = true} : vector<2x8x1xf32> -> vector<2x8x1xf32>
    %42 = vector.broadcast %41 : vector<2x8x1xf32> to vector<2x8x8xf32>
    %43 = arith.mulf %38, %42 : vector<2x8x8xf32>
    %44 = arith.truncf %43 : vector<2x8x8xf32> to vector<2x8x8xbf16>
    "tpu.trace_start"() <{level = 10 : i32, message = "bqk,bkd->bqd"}> : () -> ()
    %cst_15 = arith.constant dense<0.000000e+00> : vector<2x8x16xf32>
    %45 = tpu.matmul %44, %32, %cst_15 {dimension_numbers = #tpu.dot_dimension_numbers<[2], [1], [1], [2], [0, 0, 0, 1, 1, 2], [0], [0]>} : vector<2x8x8xbf16>, vector<2x8x16xbf16>, vector<2x8x16xf32> -> vector<2x8x16xf32>
    "tpu.trace_stop"() : () -> ()
    %46 = tpu.concatenate %29, %45 in 2 : vector<2x8x16xf32>, vector<2x8x16xf32> -> vector<2x8x32xf32>
    %47 = vector.shape_cast %46 : vector<2x8x32xf32> to vector<16x32xf32>
    %48 = arith.truncf %47 : vector<16x32xf32> to vector<16x32xbf16>
    %c0_16 = arith.constant 0 : index
    %c0_17 = arith.constant 0 : index
    %c0_18 = arith.constant 0 : index
    %49 = vector.load %arg5[%c0_16, %c0_17, %c0_18] : memref<1x32x32xbf16, #tpu.memory_space<vmem>>, vector<1x32x32xbf16>
    %50 = vector.shape_cast %49 : vector<1x32x32xbf16> to vector<32x32xbf16>
    %cst_19 = arith.constant dense<0.000000e+00> : vector<16x32xf32>
    %51 = tpu.matmul %48, %50, %cst_19 {dimension_numbers = #tpu.dot_dimension_numbers<[1], [0], [0], [1], [0, 0, 1, 1], [], []>} : vector<16x32xbf16>, vector<32x32xbf16>, vector<16x32xf32> -> vector<16x32xf32>
    %c0_20 = arith.constant 0 : index
    %c0_21 = arith.constant 0 : index
    %c0_22 = arith.constant 0 : index
    %52 = vector.load %arg6[%c0_20, %c0_21, %c0_22] : memref<1x1x32xf32, #tpu.memory_space<vmem>>, vector<1x1x32xf32>
    %53 = vector.shape_cast %52 : vector<1x1x32xf32> to vector<1x32xf32>
    %54 = vector.broadcast %53 : vector<1x32xf32> to vector<16x32xf32>
    %55 = arith.addf %51, %54 : vector<16x32xf32>
    %56 = arith.addf %3, %55 : vector<16x32xf32>
    %c0_23 = arith.constant 0 : index
    %c0_24 = arith.constant 0 : index
    %c0_25 = arith.constant 0 : index
    %57 = vector.load %arg9[%c0_23, %c0_24, %c0_25] : memref<1x1x32xf32, #tpu.memory_space<vmem>>, vector<1x1x32xf32>
    %58 = vector.shape_cast %57 : vector<1x1x32xf32> to vector<1x32xf32>
    %c0_26 = arith.constant 0 : index
    %c0_27 = arith.constant 0 : index
    %c0_28 = arith.constant 0 : index
    %59 = vector.load %arg10[%c0_26, %c0_27, %c0_28] : memref<1x1x32xf32, #tpu.memory_space<vmem>>, vector<1x1x32xf32>
    %60 = vector.shape_cast %59 : vector<1x1x32xf32> to vector<1x32xf32>
    %cst_29 = arith.constant dense<0.000000e+00> : vector<16xf32>
    %61 = vector.multi_reduction <add>, %56, %cst_29 [1] : vector<16x32xf32> to vector<16xf32>
    %62 = vector.shape_cast %61 : vector<16xf32> to vector<16x1xf32>
    %cst_30 = arith.constant 3.125000e-02 : f32
    %63 = vector.broadcast %cst_30 : f32 to vector<16x1xf32>
    %64 = arith.mulf %62, %63 : vector<16x1xf32>
    %65 = arith.mulf %56, %56 : vector<16x32xf32>
    %cst_31 = arith.constant dense<0.000000e+00> : vector<16xf32>
    %66 = vector.multi_reduction <add>, %65, %cst_31 [1] : vector<16x32xf32> to vector<16xf32>
    %67 = vector.shape_cast %66 : vector<16xf32> to vector<16x1xf32>
    %cst_32 = arith.constant 3.125000e-02 : f32
    %68 = vector.broadcast %cst_32 : f32 to vector<16x1xf32>
    %69 = arith.mulf %67, %68 : vector<16x1xf32>
    %70 = arith.mulf %64, %64 : vector<16x1xf32>
    %71 = arith.subf %69, %70 : vector<16x1xf32>
    %cst_33 = arith.constant 0.000000e+00 : f32
    %72 = vector.broadcast %cst_33 : f32 to vector<16x1xf32>
    %73 = arith.maximumf %71, %72 : vector<16x1xf32>
    %74 = vector.broadcast %64 : vector<16x1xf32> to vector<16x32xf32>
    %75 = arith.subf %56, %74 : vector<16x32xf32>
    %cst_34 = arith.constant 9.99999974E-6 : f32
    %76 = vector.broadcast %cst_34 : f32 to vector<16x1xf32>
    %77 = arith.addf %73, %76 : vector<16x1xf32>
    %78 = math.rsqrt %77 : vector<16x1xf32>
    %79 = vector.broadcast %78 : vector<16x1xf32> to vector<16x32xf32>
    %80 = arith.mulf %75, %79 : vector<16x32xf32>
    %81 = vector.broadcast %58 : vector<1x32xf32> to vector<16x32xf32>
    %82 = arith.mulf %80, %81 : vector<16x32xf32>
    %83 = vector.broadcast %60 : vector<1x32xf32> to vector<16x32xf32>
    %84 = arith.addf %82, %83 : vector<16x32xf32>
    %85 = arith.truncf %84 : vector<16x32xf32> to vector<16x32xbf16>
    %c0_35 = arith.constant 0 : index
    %c0_36 = arith.constant 0 : index
    %c0_37 = arith.constant 0 : index
    %86 = vector.load %arg7[%c0_35, %c0_36, %c0_37] : memref<1x32x32xbf16, #tpu.memory_space<vmem>>, vector<1x32x32xbf16>
    %87 = vector.shape_cast %86 : vector<1x32x32xbf16> to vector<32x32xbf16>
    %cst_38 = arith.constant dense<0.000000e+00> : vector<16x32xf32>
    %88 = tpu.matmul %85, %87, %cst_38 {dimension_numbers = #tpu.dot_dimension_numbers<[1], [0], [0], [1], [0, 0, 1, 1], [], []>} : vector<16x32xbf16>, vector<32x32xbf16>, vector<16x32xf32> -> vector<16x32xf32>
    %c0_39 = arith.constant 0 : index
    %c0_40 = arith.constant 0 : index
    %c0_41 = arith.constant 0 : index
    %89 = vector.load %arg8[%c0_39, %c0_40, %c0_41] : memref<1x1x32xf32, #tpu.memory_space<vmem>>, vector<1x1x32xf32>
    %90 = vector.shape_cast %89 : vector<1x1x32xf32> to vector<1x32xf32>
    %91 = vector.broadcast %90 : vector<1x32xf32> to vector<16x32xf32>
    %92 = arith.addf %88, %91 : vector<16x32xf32>
    %cst_42 = arith.constant 0.000000e+00 : f32
    %93 = vector.broadcast %cst_42 : f32 to vector<16x32xf32>
    %94 = arith.maximumf %92, %93 : vector<16x32xf32>
    %95 = arith.addf %84, %94 : vector<16x32xf32>
    %c0_43 = arith.constant 0 : index
    %c0_44 = arith.constant 0 : index
    %c0_45 = arith.constant 0 : index
    %96 = vector.load %arg11[%c0_43, %c0_44, %c0_45] : memref<1x1x32xf32, #tpu.memory_space<vmem>>, vector<1x1x32xf32>
    %97 = vector.shape_cast %96 : vector<1x1x32xf32> to vector<1x32xf32>
    %c0_46 = arith.constant 0 : index
    %c0_47 = arith.constant 0 : index
    %c0_48 = arith.constant 0 : index
    %98 = vector.load %arg12[%c0_46, %c0_47, %c0_48] : memref<1x1x32xf32, #tpu.memory_space<vmem>>, vector<1x1x32xf32>
    %99 = vector.shape_cast %98 : vector<1x1x32xf32> to vector<1x32xf32>
    %cst_49 = arith.constant dense<0.000000e+00> : vector<16xf32>
    %100 = vector.multi_reduction <add>, %95, %cst_49 [1] : vector<16x32xf32> to vector<16xf32>
    %101 = vector.shape_cast %100 : vector<16xf32> to vector<16x1xf32>
    %cst_50 = arith.constant 3.125000e-02 : f32
    %102 = vector.broadcast %cst_50 : f32 to vector<16x1xf32>
    %103 = arith.mulf %101, %102 : vector<16x1xf32>
    %104 = arith.mulf %95, %95 : vector<16x32xf32>
    %cst_51 = arith.constant dense<0.000000e+00> : vector<16xf32>
    %105 = vector.multi_reduction <add>, %104, %cst_51 [1] : vector<16x32xf32> to vector<16xf32>
    %106 = vector.shape_cast %105 : vector<16xf32> to vector<16x1xf32>
    %cst_52 = arith.constant 3.125000e-02 : f32
    %107 = vector.broadcast %cst_52 : f32 to vector<16x1xf32>
    %108 = arith.mulf %106, %107 : vector<16x1xf32>
    %109 = arith.mulf %103, %103 : vector<16x1xf32>
    %110 = arith.subf %108, %109 : vector<16x1xf32>
    %cst_53 = arith.constant 0.000000e+00 : f32
    %111 = vector.broadcast %cst_53 : f32 to vector<16x1xf32>
    %112 = arith.maximumf %110, %111 : vector<16x1xf32>
    %113 = vector.broadcast %103 : vector<16x1xf32> to vector<16x32xf32>
    %114 = arith.subf %95, %113 : vector<16x32xf32>
    %cst_54 = arith.constant 9.99999974E-6 : f32
    %115 = vector.broadcast %cst_54 : f32 to vector<16x1xf32>
    %116 = arith.addf %112, %115 : vector<16x1xf32>
    %117 = math.rsqrt %116 : vector<16x1xf32>
    %118 = vector.broadcast %117 : vector<16x1xf32> to vector<16x32xf32>
    %119 = arith.mulf %114, %118 : vector<16x32xf32>
    %120 = vector.broadcast %97 : vector<1x32xf32> to vector<16x32xf32>
    %121 = arith.mulf %119, %120 : vector<16x32xf32>
    %122 = vector.broadcast %99 : vector<1x32xf32> to vector<16x32xf32>
    %123 = arith.addf %121, %122 : vector<16x32xf32>
    %c0_55 = arith.constant 0 : index
    %c0_56 = arith.constant 0 : index
    %124 = vector.load %arg18[%c0_55, %c0_56] : memref<16x32xf32, #tpu.memory_space<vmem>>, vector<16x32xf32>
    tpu.vector_store %arg18[%c0_55, %c0_56], %123 {strides = array<i32>} : memref<16x32xf32, #tpu.memory_space<vmem>>, vector<16x32xf32>,
    %c1_i32 = arith.constant 1 : i32
    %125 = arith.cmpi eq, %arg0, %c1_i32 : i32
    %126 = arith.extui %125 : i1 to i32
    %c0_i32_57 = arith.constant 0 : i32
    %127 = arith.cmpi ne, %126, %c0_i32_57 : i32
    scf.if %127 {
      %128 = vector.shape_cast %123 : vector<16x32xf32> to vector<2x8x32xf32>
      %cst_58 = arith.constant dense<0xFF800000> : vector<2x32xf32>
      %129 = vector.multi_reduction <maximumf>, %128, %cst_58 [1] : vector<2x8x32xf32> to vector<2x32xf32>
      %130 = arith.truncf %129 : vector<2x32xf32> to vector<2x32xbf16>
      %c0_59 = arith.constant 0 : index
      %c0_60 = arith.constant 0 : index
      %c0_61 = arith.constant 0 : index
      %131 = vector.load %arg13[%c0_59, %c0_60, %c0_61] : memref<1x32x32xbf16, #tpu.memory_space<vmem>>, vector<1x32x32xbf16>
      %132 = vector.shape_cast %131 : vector<1x32x32xbf16> to vector<32x32xbf16>
      %cst_62 = arith.constant dense<0.000000e+00> : vector<2x32xf32>
      %133 = tpu.matmul %130, %132, %cst_62 {dimension_numbers = #tpu.dot_dimension_numbers<[1], [0], [0], [1], [0, 0, 1, 1], [], []>} : vector<2x32xbf16>, vector<32x32xbf16>, vector<2x32xf32> -> vector<2x32xf32>
      %c0_63 = arith.constant 0 : index
      %c0_64 = arith.constant 0 : index
      %c0_65 = arith.constant 0 : index
      %134 = vector.load %arg14[%c0_63, %c0_64, %c0_65] : memref<1x1x32xf32, #tpu.memory_space<vmem>>, vector<1x1x32xf32>
      %135 = vector.shape_cast %134 : vector<1x1x32xf32> to vector<1x32xf32>
      %136 = vector.broadcast %135 : vector<1x32xf32> to vector<2x32xf32>
      %137 = arith.addf %133, %136 : vector<2x32xf32>
      %cst_66 = arith.constant 0.000000e+00 : f32
      %138 = vector.broadcast %cst_66 : f32 to vector<2x32xf32>
      %139 = arith.maximumf %137, %138 : vector<2x32xf32>
      %140 = arith.truncf %139 : vector<2x32xf32> to vector<2x32xbf16>
      %c0_67 = arith.constant 0 : index
      %c0_68 = arith.constant 0 : index
      %141 = vector.load %arg15[%c0_67, %c0_68] : memref<32x3xbf16, #tpu.memory_space<vmem>>, vector<32x3xbf16>
      %cst_69 = arith.constant dense<0.000000e+00> : vector<2x3xf32>
      %142 = tpu.matmul %140, %141, %cst_69 {dimension_numbers = #tpu.dot_dimension_numbers<[1], [0], [0], [1], [0, 0, 1, 1], [], []>} : vector<2x32xbf16>, vector<32x3xbf16>, vector<2x3xf32> -> vector<2x3xf32>
      %c0_70 = arith.constant 0 : index
      %c0_71 = arith.constant 0 : index
      %143 = vector.load %arg16[%c0_70, %c0_71] : memref<1x3xf32, #tpu.memory_space<vmem>>, vector<1x3xf32>
      %144 = vector.broadcast %143 : vector<1x3xf32> to vector<2x3xf32>
      %145 = arith.addf %142, %144 : vector<2x3xf32>
      %c0_72 = arith.constant 0 : index
      %c0_73 = arith.constant 0 : index
      %146 = vector.load %arg17[%c0_72, %c0_73] : memref<2x3xf32, #tpu.memory_space<vmem>>, vector<2x3xf32>
      tpu.vector_store %arg17[%c0_72, %c0_73], %145 {strides = array<i32>} : memref<2x3xf32, #tpu.memory_space<vmem>>, vector<2x3xf32>,
    } else {
    }
    return
  }
  func.func @transform_0(%arg0: i32) -> (i32, i32) {
    %c0_i32 = arith.constant 0 : i32
    %c0_i32_0 = arith.constant 0 : i32
    %c0_i32_1 = arith.constant 0 : i32
    return %c0_i32, %c0_i32_0 : i32, i32
  }
  func.func @transform_1(%arg0: i32) -> (i32, i32) {
    %c0_i32 = arith.constant 0 : i32
    %c0_i32_0 = arith.constant 0 : i32
    %c0_i32_1 = arith.constant 0 : i32
    return %c0_i32, %c0_i32_0 : i32, i32
  }
  func.func @transform_2(%arg0: i32) -> (i32, i32, i32) {
    %c0_i32 = arith.constant 0 : i32
    %c0_i32_0 = arith.constant 0 : i32
    %c0_i32_1 = arith.constant 0 : i32
    return %arg0, %c0_i32, %c0_i32_0 : i32, i32, i32
  }
  func.func @transform_3(%arg0: i32) -> (i32, i32, i32) {
    %c0_i32 = arith.constant 0 : i32
    %c0_i32_0 = arith.constant 0 : i32
    %c0_i32_1 = arith.constant 0 : i32
    return %arg0, %c0_i32, %c0_i32_0 : i32, i32, i32
  }
  func.func @transform_4(%arg0: i32) -> (i32, i32, i32) {
    %c0_i32 = arith.constant 0 : i32
    %c0_i32_0 = arith.constant 0 : i32
    %c0_i32_1 = arith.constant 0 : i32
    return %arg0, %c0_i32, %c0_i32_0 : i32, i32, i32
  }
  func.func @transform_5(%arg0: i32) -> (i32, i32, i32) {
    %c0_i32 = arith.constant 0 : i32
    %c0_i32_0 = arith.constant 0 : i32
    %c0_i32_1 = arith.constant 0 : i32
    return %arg0, %c0_i32, %c0_i32_0 : i32, i32, i32
  }
  func.func @transform_6(%arg0: i32) -> (i32, i32, i32) {
    %c0_i32 = arith.constant 0 : i32
    %c0_i32_0 = arith.constant 0 : i32
    %c0_i32_1 = arith.constant 0 : i32
    return %arg0, %c0_i32, %c0_i32_0 : i32, i32, i32
  }
  func.func @transform_7(%arg0: i32) -> (i32, i32, i32) {
    %c0_i32 = arith.constant 0 : i32
    %c0_i32_0 = arith.constant 0 : i32
    %c0_i32_1 = arith.constant 0 : i32
    return %arg0, %c0_i32, %c0_i32_0 : i32, i32, i32
  }
  func.func @transform_8(%arg0: i32) -> (i32, i32, i32) {
    %c0_i32 = arith.constant 0 : i32
    %c0_i32_0 = arith.constant 0 : i32
    %c0_i32_1 = arith.constant 0 : i32
    return %arg0, %c0_i32, %c0_i32_0 : i32, i32, i32
  }
  func.func @transform_9(%arg0: i32) -> (i32, i32, i32) {
    %c0_i32 = arith.constant 0 : i32
    %c0_i32_0 = arith.constant 0 : i32
    %c0_i32_1 = arith.constant 0 : i32
    return %arg0, %c0_i32, %c0_i32_0 : i32, i32, i32
  }
  func.func @transform_10(%arg0: i32) -> (i32, i32, i32) {
    %c0_i32 = arith.constant 0 : i32
    %c0_i32_0 = arith.constant 0 : i32
    %c0_i32_1 = arith.constant 0 : i32
    return %arg0, %c0_i32, %c0_i32_0 : i32, i32, i32
  }
  func.func @transform_11(%arg0: i32) -> (i32, i32, i32) {
    %c0_i32 = arith.constant 0 : i32
    %c0_i32_0 = arith.constant 0 : i32
    %c0_i32_1 = arith.constant 0 : i32
    return %arg0, %c0_i32, %c0_i32_0 : i32, i32, i32
  }
  func.func @transform_12(%arg0: i32) -> (i32, i32, i32) {
    %c0_i32 = arith.constant 0 : i32
    %c0_i32_0 = arith.constant 0 : i32
    %c0_i32_1 = arith.constant 0 : i32
    %c0_i32_2 = arith.constant 0 : i32
    return %c0_i32, %c0_i32_0, %c0_i32_1 : i32, i32, i32
  }
  func.func @transform_13(%arg0: i32) -> (i32, i32, i32) {
    %c0_i32 = arith.constant 0 : i32
    %c0_i32_0 = arith.constant 0 : i32
    %c0_i32_1 = arith.constant 0 : i32
    %c0_i32_2 = arith.constant 0 : i32
    return %c0_i32, %c0_i32_0, %c0_i32_1 : i32, i32, i32
  }
  func.func @transform_14(%arg0: i32) -> (i32, i32) {
    %c0_i32 = arith.constant 0 : i32
    %c0_i32_0 = arith.constant 0 : i32
    %c0_i32_1 = arith.constant 0 : i32
    return %c0_i32, %c0_i32_0 : i32, i32
  }
  func.func @transform_15(%arg0: i32) -> (i32, i32) {
    %c0_i32 = arith.constant 0 : i32
    %c0_i32_0 = arith.constant 0 : i32
    %c0_i32_1 = arith.constant 0 : i32
    return %c0_i32, %c0_i32_0 : i32, i32
  }
  func.func @transform_16(%arg0: i32) -> (i32, i32) {
    %c0_i32 = arith.constant 0 : i32
    %c0_i32_0 = arith.constant 0 : i32
    %c0_i32_1 = arith.constant 0 : i32
    return %c0_i32, %c0_i32_0 : i32, i32
  }
}

</mosaic_0001>

<llo_original>
// kernel: tpu_custom_call.1
$region0: #{tpu_custom_call.1}
  #allocation0 [shape = 'u32[]', space=smem, size = 0x4, offset = 0x4, fixed_abs, tag = 'smem constant byte address 0x4 - core index']
  #allocation1 [shape = 'u32[144,128]{1,0:T(1,128)}', space=vmem, size = 0x12000, scoped, tag = 'internal scratch']
  #allocation2 [shape = 'f32[16,32]{1,0:T(8,128)}', space=vmem, size = 0x2000, scoped, tag = 'scratch operand']
  %s0 = inlined_call_operand.vmem [shape: f32[16,32], index: 0, kind: input, shape index: {}]
  %s1 = inlined_call_operand.hbm [shape: bf16[32,32], index: 1, kind: input, shape index: {}]
  %s2 = inlined_call_operand.hbm [shape: bf16[2,32,96], index: 2, kind: input, shape index: {}]
  %s3 = inlined_call_operand.hbm [shape: f32[2,1,96], index: 3, kind: input, shape index: {}]
  %s4 = inlined_call_operand.hbm [shape: bf16[2,32,32], index: 4, kind: input, shape index: {}]
  %s5 = inlined_call_operand.hbm [shape: f32[2,1,32], index: 5, kind: input, shape index: {}]
  %s6 = inlined_call_operand.hbm [shape: bf16[2,32,32], index: 6, kind: input, shape index: {}]
  %s7 = inlined_call_operand.hbm [shape: f32[2,1,32], index: 7, kind: input, shape index: {}]
  %s8 = inlined_call_operand.hbm [shape: f32[2,1,32], index: 8, kind: input, shape index: {}]
  %s9 = inlined_call_operand.hbm [shape: f32[2,1,32], index: 9, kind: input, shape index: {}]
  %s10 = inlined_call_operand.vmem [shape: f32[2,1,32], index: 10, kind: input, shape index: {}]
  %s11 = inlined_call_operand.vmem [shape: f32[2,1,32], index: 11, kind: input, shape index: {}]
  %s12 = inlined_call_operand.vmem [shape: bf16[1,32,32], index: 12, kind: input, shape index: {}]
  %s13 = inlined_call_operand.vmem [shape: f32[1,1,32], index: 13, kind: input, shape index: {}]
  %s14 = inlined_call_operand.vmem [shape: bf16[32,3], index: 14, kind: input, shape index: {}]
  %s15 = inlined_call_operand.vmem [shape: f32[1,3], index: 15, kind: input, shape index: {}]
  %s16 = inlined_call_operand.hbm [shape: f32[2,3], index: 16, kind: output, shape index: {}]
  %s17 = sld [smem:[#allocation0]]
  $region141: #{tpu_custom_call.1} parent=0
    _
  %s19 = ssub.s32 1, %s17
  %s20 = scalar_select 0, %s19, %s17
  $region1: #{tpu_custom_call.1} parent=0
    #allocation3 [shape = 'u8[8192]{0}', space=vmem, size = 0x2000, scoped, tag = 'input window, operand 1, single buffered']
    #allocation4 [shape = 's32[2]{0}', space=sflag, size = 0x8, scoped, tag = 'scoped memory for tpu_custom_call.1']
    #allocation5 [shape = 's32[2]{0}', space=sflag, size = 0x8, scoped, tag = 'scoped memory for tpu_custom_call.1']
    #allocation6 [shape = 'u8[16384]{0}', space=vmem, size = 0x4000, scoped, tag = 'input window, operand 2']
    #allocation7 [shape = 's32[2]{0}', space=sflag, size = 0x8, scoped, tag = 'scoped memory for tpu_custom_call.1']
    #allocation8 [shape = 'u8[1024]{0}', space=vmem, size = 0x400, scoped, tag = 'input window, operand 3']
    #allocation9 [shape = 'u8[16384]{0}', space=vmem, size = 0x4000, scoped, tag = 'input window, operand 4']
    #allocation10 [shape = 's32[2]{0}', space=sflag, size = 0x8, scoped, tag = 'scoped memory for tpu_custom_call.1']
    #allocation11 [shape = 'u8[1024]{0}', space=vmem, size = 0x400, scoped, tag = 'input window, operand 5']
    #allocation12 [shape = 'u8[16384]{0}', space=vmem, size = 0x4000, scoped, tag = 'input window, operand 6']
    #allocation13 [shape = 's32[2]{0}', space=sflag, size = 0x8, scoped, tag = 'scoped memory for tpu_custom_call.1']
    #allocation14 [shape = 'u8[1024]{0}', space=vmem, size = 0x400, scoped, tag = 'input window, operand 7']
    #allocation15 [shape = 'u8[1024]{0}', space=vmem, size = 0x400, scoped, tag = 'input window, operand 8']
    #allocation16 [shape = 's32[2]{0}', space=sflag, size = 0x8, scoped, tag = 'scoped memory for tpu_custom_call.1']
    #allocation17 [shape = 'u8[1024]{0}', space=vmem, size = 0x400, scoped, tag = 'input window, operand 9']
    #allocation18 [shape = 'u8[1024]{0}', space=vmem, size = 0x400, scoped, tag = 'output window, operand 0, single buffered']
    %21 = vsyncpa [#allocation4], 0
    %22 = vsyncpa [#allocation7], 0
    %s23 = scalar_lea.sflag [#allocation7], 1
    %24 = vsyncpa %s23, 0
    %25 = vsyncpa [#allocation10], 0
    %s26 = scalar_lea.sflag [#allocation10], 1
    %27 = vsyncpa %s26, 0
    %28 = vsyncpa [#allocation13], 0
    %s29 = scalar_lea.sflag [#allocation13], 1
    %30 = vsyncpa %s29, 0
    %31 = vsyncpa [#allocation16], 0
    %s32 = scalar_lea.sflag [#allocation16], 1
    %33 = vsyncpa %s32, 0
    %34 = vsyncpa [#allocation5], 0
    loop: start=0, step=1, limit=4
    $region2: #{tpu_custom_call.1} parent=1 // loop_pre_header
      _
    $region3: #{tpu_custom_call.1} parent=1 // loop_header
      %s36 = sphi 0, %s40
      %p37 = scmp.ge.s32.totalorder %s36, 4
      %s44 = sphi 0, %s44
      %s46 = sphi 0, %s44
      %s47 = sphi 0, %s46
      %s61 = sphi 0, %s47
      %s65 = sphi 0, %s65
      %s67 = sphi 0, %s65
      %s68 = sphi 0, %s67
      %s82 = sphi 0, %s68
      %s88 = sphi 0, %s90
      %s91 = sphi 0, %s88
      %s92 = sphi 0, %s91
      %s108 = sphi 0, %s92
      %s114 = sphi 0, %s116
      %s117 = sphi 0, %s114
      %s118 = sphi 0, %s117
      %s134 = sphi 0, %s118
      %s140 = sphi 0, %s142
      %s143 = sphi 0, %s140
      %s144 = sphi 0, %s143
      %s160 = sphi 0, %s144
      %s166 = sphi 0, %s168
      %s169 = sphi 0, %s166
      %s170 = sphi 0, %s169
      %s186 = sphi 0, %s170
      %s192 = sphi 0, %s194
      %s195 = sphi 0, %s192
      %s196 = sphi 0, %s195
      %s212 = sphi 0, %s196
      %s218 = sphi 0, %s220
      %s221 = sphi 0, %s218
      %s222 = sphi 0, %s221
      %s238 = sphi 0, %s222
      %s244 = sphi 0, %s246
      %s247 = sphi 0, %s244
      %s248 = sphi 0, %s247
      %s264 = sphi 0, %s248
      %s270 = sphi 0, %s272
      %s273 = sphi 0, %s270
      %s274 = sphi 0, %s273
      %s290 = sphi 0, %s274
      %s296 = sphi 0, %s298
      %s299 = sphi 0, %s296
      %s300 = sphi 0, %s299
      %s316 = sphi 0, %s300
      %s322 = sphi 0, %s324
      %s325 = sphi 0, %s322
      %s326 = sphi 0, %s325
      %s342 = sphi 0, %s326
      %s346 = sphi 0, %s346
      %s348 = sphi 0, %s346
      %s349 = sphi 0, %s348
      %s363 = sphi 0, %s349
      %s367 = sphi 0, %s367
      %s369 = sphi 0, %s367
      %s370 = sphi 0, %s369
      %s384 = sphi 0, %s370
      %s388 = sphi 0, %s388
      %s390 = sphi 0, %s388
      %s391 = sphi 0, %s390
      %s405 = sphi 0, %s391
      %s409 = sphi 0, %s409
      %s411 = sphi 0, %s409
      %s412 = sphi 0, %s411
      %s426 = sphi 0, %s412
      %s430 = sphi 0, %s430
      %s432 = sphi 0, %s430
      %s433 = sphi 0, %s432
      %s447 = sphi 0, %s433
    $region4: #{tpu_custom_call.1} parent=1 // loop_header_branch
      %39 = sbr.rel (%p37) target = $region8
    $region5: #{tpu_custom_call.1} parent=1 // loop_body
      %s41 = ssub.s32 %s36, 1
      %s42 = ssub.s32 %s36, 2
      %s43 = sadd.s32 %s36, 1
      %s45 = sadd.s32 %s44, 1
      %p48 = scmp.eq.s32.totalorder %s36, 1
      %p49 = scmp.ne.s32.totalorder %s44, %s46
      %p50 = scmp.eq.s32.totalorder %s36, 0
      %p51 = por %p49, %p50
      %p52 = scmp.ne.s32.totalorder %s44, %s46
      %p53 = scmp.eq.s32.totalorder %s41, 1
      %p54 = por %p52, %p53
      %p55 = scmp.ne.s32.totalorder %s46, %s47
      %p56 = scmp.eq.s32.totalorder %s41, 0
      %p57 = por %p55, %p56
      %p58 = scmp.ne.s32.totalorder %s46, %s47
      %p59 = scmp.eq.s32.totalorder %s42, 1
      %p60 = por %p58, %p59
      %p62 = scmp.ne.s32.totalorder %s47, %s61
      %p63 = scmp.eq.s32.totalorder %s42, 0
      %p64 = por %p62, %p63
      %s66 = sadd.s32 %s65, 1
      %p69 = scmp.eq.s32.totalorder %s36, 1
      %p70 = scmp.ne.s32.totalorder %s65, %s67
      %p71 = scmp.eq.s32.totalorder %s36, 0
      %p72 = por %p70, %p71
      %p73 = scmp.ne.s32.totalorder %s65, %s67
      %p74 = scmp.eq.s32.totalorder %s41, 1
      %p75 = por %p73, %p74
      %p76 = scmp.ne.s32.totalorder %s67, %s68
      %p77 = scmp.eq.s32.totalorder %s41, 0
      %p78 = por %p76, %p77
      %p79 = scmp.ne.s32.totalorder %s67, %s68
      %p80 = scmp.eq.s32.totalorder %s42, 1
      %p81 = por %p79, %p80
      %p83 = scmp.ne.s32.totalorder %s68, %s82
      %p84 = scmp.eq.s32.totalorder %s42, 0
      %p85 = por %p83, %p84
      %s86 = ssub.s32 %s36, %s43
      %p87 = scmp.eq.s32.totalorder %s86, 0
      %s89 = sadd.s32 %s88, 1
      %s90 = scalar_select %p87, %s88, %s89
      %p93 = pneg %p87
      %p94 = scmp.eq.s32.totalorder %s36, 1
      %p95 = por %p93, %p94
      %p96 = scmp.ne.s32.totalorder %s88, %s91
      %p97 = scmp.eq.s32.totalorder %s36, 0
      %p98 = por %p96, %p97
      %p99 = scmp.ne.s32.totalorder %s88, %s91
      %p100 = scmp.eq.s32.totalorder %s41, 1
      %p101 = por %p99, %p100
      %p102 = scmp.ne.s32.totalorder %s91, %s92
      %p103 = scmp.eq.s32.totalorder %s41, 0
      %p104 = por %p102, %p103
      %p105 = scmp.ne.s32.totalorder %s91, %s92
      %p106 = scmp.eq.s32.totalorder %s42, 1
      %p107 = por %p105, %p106
      %p109 = scmp.ne.s32.totalorder %s92, %s108
      %p110 = scmp.eq.s32.totalorder %s42, 0
      %p111 = por %p109, %p110
      %s112 = ssub.s32 %s36, %s43
      %p113 = scmp.eq.s32.totalorder %s112, 0
      %s115 = sadd.s32 %s114, 1
      %s116 = scalar_select %p113, %s114, %s115
      %p119 = pneg %p113
      %p120 = scmp.eq.s32.totalorder %s36, 1
      %p121 = por %p119, %p120
      %p122 = scmp.ne.s32.totalorder %s114, %s117
      %p123 = scmp.eq.s32.totalorder %s36, 0
      %p124 = por %p122, %p123
      %p125 = scmp.ne.s32.totalorder %s114, %s117
      %p126 = scmp.eq.s32.totalorder %s41, 1
      %p127 = por %p125, %p126
      %p128 = scmp.ne.s32.totalorder %s117, %s118
      %p129 = scmp.eq.s32.totalorder %s41, 0
      %p130 = por %p128, %p129
      %p131 = scmp.ne.s32.totalorder %s117, %s118
      %p132 = scmp.eq.s32.totalorder %s42, 1
      %p133 = por %p131, %p132
      %p135 = scmp.ne.s32.totalorder %s118, %s134
      %p136 = scmp.eq.s32.totalorder %s42, 0
      %p137 = por %p135, %p136
      %s138 = ssub.s32 %s36, %s43
      %p139 = scmp.eq.s32.totalorder %s138, 0
      %s141 = sadd.s32 %s140, 1
      %s142 = scalar_select %p139, %s140, %s141
      %p145 = pneg %p139
      %p146 = scmp.eq.s32.totalorder %s36, 1
      %p147 = por %p145, %p146
      %p148 = scmp.ne.s32.totalorder %s140, %s143
      %p149 = scmp.eq.s32.totalorder %s36, 0
      %p150 = por %p148, %p149
      %p151 = scmp.ne.s32.totalorder %s140, %s143
      %p152 = scmp.eq.s32.totalorder %s41, 1
      %p153 = por %p151, %p152
      %p154 = scmp.ne.s32.totalorder %s143, %s144
      %p155 = scmp.eq.s32.totalorder %s41, 0
      %p156 = por %p154, %p155
      %p157 = scmp.ne.s32.totalorder %s143, %s144
      %p158 = scmp.eq.s32.totalorder %s42, 1
      %p159 = por %p157, %p158
      %p161 = scmp.ne.s32.totalorder %s144, %s160
      %p162 = scmp.eq.s32.totalorder %s42, 0
      %p163 = por %p161, %p162
      %s164 = ssub.s32 %s36, %s43
      %p165 = scmp.eq.s32.totalorder %s164, 0
      %s167 = sadd.s32 %s166, 1
      %s168 = scalar_select %p165, %s166, %s167
      %p171 = pneg %p165
      %p172 = scmp.eq.s32.totalorder %s36, 1
      %p173 = por %p171, %p172
      %p174 = scmp.ne.s32.totalorder %s166, %s169
      %p175 = scmp.eq.s32.totalorder %s36, 0
      %p176 = por %p174, %p175
      %p177 = scmp.ne.s32.totalorder %s166, %s169
      %p178 = scmp.eq.s32.totalorder %s41, 1
      %p179 = por %p177, %p178
      %p180 = scmp.ne.s32.totalorder %s169, %s170
      %p181 = scmp.eq.s32.totalorder %s41, 0
      %p182 = por %p180, %p181
      %p183 = scmp.ne.s32.totalorder %s169, %s170
      %p184 = scmp.eq.s32.totalorder %s42, 1
      %p185 = por %p183, %p184
      %p187 = scmp.ne.s32.totalorder %s170, %s186
      %p188 = scmp.eq.s32.totalorder %s42, 0
      %p189 = por %p187, %p188
      %s190 = ssub.s32 %s36, %s43
      %p191 = scmp.eq.s32.totalorder %s190, 0
      %s193 = sadd.s32 %s192, 1
      %s194 = scalar_select %p191, %s192, %s193
      %p197 = pneg %p191
      %p198 = scmp.eq.s32.totalorder %s36, 1
      %p199 = por %p197, %p198
      %p200 = scmp.ne.s32.totalorder %s192, %s195
      %p201 = scmp.eq.s32.totalorder %s36, 0
      %p202 = por %p200, %p201
      %p203 = scmp.ne.s32.totalorder %s192, %s195
      %p204 = scmp.eq.s32.totalorder %s41, 1
      %p205 = por %p203, %p204
      %p206 = scmp.ne.s32.totalorder %s195, %s196
      %p207 = scmp.eq.s32.totalorder %s41, 0
      %p208 = por %p206, %p207
      %p209 = scmp.ne.s32.totalorder %s195, %s196
      %p210 = scmp.eq.s32.totalorder %s42, 1
      %p211 = por %p209, %p210
      %p213 = scmp.ne.s32.totalorder %s196, %s212
      %p214 = scmp.eq.s32.totalorder %s42, 0
      %p215 = por %p213, %p214
      %s216 = ssub.s32 %s36, %s43
      %p217 = scmp.eq.s32.totalorder %s216, 0
      %s219 = sadd.s32 %s218, 1
      %s220 = scalar_select %p217, %s218, %s219
      %p223 = pneg %p217
      %p224 = scmp.eq.s32.totalorder %s36, 1
      %p225 = por %p223, %p224
      %p226 = scmp.ne.s32.totalorder %s218, %s221
      %p227 = scmp.eq.s32.totalorder %s36, 0
      %p228 = por %p226, %p227
      %p229 = scmp.ne.s32.totalorder %s218, %s221
      %p230 = scmp.eq.s32.totalorder %s41, 1
      %p231 = por %p229, %p230
      %p232 = scmp.ne.s32.totalorder %s221, %s222
      %p233 = scmp.eq.s32.totalorder %s41, 0
      %p234 = por %p232, %p233
      %p235 = scmp.ne.s32.totalorder %s221, %s222
      %p236 = scmp.eq.s32.totalorder %s42, 1
      %p237 = por %p235, %p236
      %p239 = scmp.ne.s32.totalorder %s222, %s238
      %p240 = scmp.eq.s32.totalorder %s42, 0
      %p241 = por %p239, %p240
      %s242 = ssub.s32 %s36, %s43
      %p243 = scmp.eq.s32.totalorder %s242, 0
      %s245 = sadd.s32 %s244, 1
      %s246 = scalar_select %p243, %s244, %s245
      %p249 = pneg %p243
      %p250 = scmp.eq.s32.totalorder %s36, 1
      %p251 = por %p249, %p250
      %p252 = scmp.ne.s32.totalorder %s244, %s247
      %p253 = scmp.eq.s32.totalorder %s36, 0
      %p254 = por %p252, %p253
      %p255 = scmp.ne.s32.totalorder %s244, %s247
      %p256 = scmp.eq.s32.totalorder %s41, 1
      %p257 = por %p255, %p256
      %p258 = scmp.ne.s32.totalorder %s247, %s248
      %p259 = scmp.eq.s32.totalorder %s41, 0
      %p260 = por %p258, %p259
      %p261 = scmp.ne.s32.totalorder %s247, %s248
      %p262 = scmp.eq.s32.totalorder %s42, 1
      %p263 = por %p261, %p262
      %p265 = scmp.ne.s32.totalorder %s248, %s264
      %p266 = scmp.eq.s32.totalorder %s42, 0
      %p267 = por %p265, %p266
      %s268 = ssub.s32 %s36, %s43
      %p269 = scmp.eq.s32.totalorder %s268, 0
      %s271 = sadd.s32 %s270, 1
      %s272 = scalar_select %p269, %s270, %s271
      %p275 = pneg %p269
      %p276 = scmp.eq.s32.totalorder %s36, 1
      %p277 = por %p275, %p276
      %p278 = scmp.ne.s32.totalorder %s270, %s273
      %p279 = scmp.eq.s32.totalorder %s36, 0
      %p280 = por %p278, %p279
      %p281 = scmp.ne.s32.totalorder %s270, %s273
      %p282 = scmp.eq.s32.totalorder %s41, 1
      %p283 = por %p281, %p282
      %p284 = scmp.ne.s32.totalorder %s273, %s274
      %p285 = scmp.eq.s32.totalorder %s41, 0
      %p286 = por %p284, %p285
      %p287 = scmp.ne.s32.totalorder %s273, %s274
      %p288 = scmp.eq.s32.totalorder %s42, 1
      %p289 = por %p287, %p288
      %p291 = scmp.ne.s32.totalorder %s274, %s290
      %p292 = scmp.eq.s32.totalorder %s42, 0
      %p293 = por %p291, %p292
      %s294 = ssub.s32 %s36, %s43
      %p295 = scmp.eq.s32.totalorder %s294, 0
      %s297 = sadd.s32 %s296, 1
      %s298 = scalar_select %p295, %s296, %s297
      %p301 = pneg %p295
      %p302 = scmp.eq.s32.totalorder %s36, 1
      %p303 = por %p301, %p302
      %p304 = scmp.ne.s32.totalorder %s296, %s299
      %p305 = scmp.eq.s32.totalorder %s36, 0
      %p306 = por %p304, %p305
      %p307 = scmp.ne.s32.totalorder %s296, %s299
      %p308 = scmp.eq.s32.totalorder %s41, 1
      %p309 = por %p307, %p308
      %p310 = scmp.ne.s32.totalorder %s299, %s300
      %p311 = scmp.eq.s32.totalorder %s41, 0
      %p312 = por %p310, %p311
      %p313 = scmp.ne.s32.totalorder %s299, %s300
      %p314 = scmp.eq.s32.totalorder %s42, 1
      %p315 = por %p313, %p314
      %p317 = scmp.ne.s32.totalorder %s300, %s316
      %p318 = scmp.eq.s32.totalorder %s42, 0
      %p319 = por %p317, %p318
      %s320 = ssub.s32 %s36, %s43
      %p321 = scmp.eq.s32.totalorder %s320, 0
      %s323 = sadd.s32 %s322, 1
      %s324 = scalar_select %p321, %s322, %s323
      %p327 = pneg %p321
      %p328 = scmp.eq.s32.totalorder %s36, 1
      %p329 = por %p327, %p328
      %p330 = scmp.ne.s32.totalorder %s322, %s325
      %p331 = scmp.eq.s32.totalorder %s36, 0
      %p332 = por %p330, %p331
      %p333 = scmp.ne.s32.totalorder %s322, %s325
      %p334 = scmp.eq.s32.totalorder %s41, 1
      %p335 = por %p333, %p334
      %p336 = scmp.ne.s32.totalorder %s325, %s326
      %p337 = scmp.eq.s32.totalorder %s41, 0
      %p338 = por %p336, %p337
      %p339 = scmp.ne.s32.totalorder %s325, %s326
      %p340 = scmp.eq.s32.totalorder %s42, 1
      %p341 = por %p339, %p340
      %p343 = scmp.ne.s32.totalorder %s326, %s342
      %p344 = scmp.eq.s32.totalorder %s42, 0
      %p345 = por %p343, %p344
      %s347 = sadd.s32 %s346, 1
      %p350 = scmp.eq.s32.totalorder %s36, 1
      %p351 = scmp.ne.s32.totalorder %s346, %s348
      %p352 = scmp.eq.s32.totalorder %s36, 0
      %p353 = por %p351, %p352
      %p354 = scmp.ne.s32.totalorder %s346, %s348
      %p355 = scmp.eq.s32.totalorder %s41, 1
      %p356 = por %p354, %p355
      %p357 = scmp.ne.s32.totalorder %s348, %s349
      %p358 = scmp.eq.s32.totalorder %s41, 0
      %p359 = por %p357, %p358
      %p360 = scmp.ne.s32.totalorder %s348, %s349
      %p361 = scmp.eq.s32.totalorder %s42, 1
      %p362 = por %p360, %p361
      %p364 = scmp.ne.s32.totalorder %s349, %s363
      %p365 = scmp.eq.s32.totalorder %s42, 0
      %p366 = por %p364, %p365
      %s368 = sadd.s32 %s367, 1
      %p371 = scmp.eq.s32.totalorder %s36, 1
      %p372 = scmp.ne.s32.totalorder %s367, %s369
      %p373 = scmp.eq.s32.totalorder %s36, 0
      %p374 = por %p372, %p373
      %p375 = scmp.ne.s32.totalorder %s367, %s369
      %p376 = scmp.eq.s32.totalorder %s41, 1
      %p377 = por %p375, %p376
      %p378 = scmp.ne.s32.totalorder %s369, %s370
      %p379 = scmp.eq.s32.totalorder %s41, 0
      %p380 = por %p378, %p379
      %p381 = scmp.ne.s32.totalorder %s369, %s370
      %p382 = scmp.eq.s32.totalorder %s42, 1
      %p383 = por %p381, %p382
      %p385 = scmp.ne.s32.totalorder %s370, %s384
      %p386 = scmp.eq.s32.totalorder %s42, 0
      %p387 = por %p385, %p386
      %s389 = sadd.s32 %s388, 1
      %p392 = scmp.eq.s32.totalorder %s36, 1
      %p393 = scmp.ne.s32.totalorder %s388, %s390
      %p394 = scmp.eq.s32.totalorder %s36, 0
      %p395 = por %p393, %p394
      %p396 = scmp.ne.s32.totalorder %s388, %s390
      %p397 = scmp.eq.s32.totalorder %s41, 1
      %p398 = por %p396, %p397
      %p399 = scmp.ne.s32.totalorder %s390, %s391
      %p400 = scmp.eq.s32.totalorder %s41, 0
      %p401 = por %p399, %p400
      %p402 = scmp.ne.s32.totalorder %s390, %s391
      %p403 = scmp.eq.s32.totalorder %s42, 1
      %p404 = por %p402, %p403
      %p406 = scmp.ne.s32.totalorder %s391, %s405
      %p407 = scmp.eq.s32.totalorder %s42, 0
      %p408 = por %p406, %p407
      %s410 = sadd.s32 %s409, 1
      %p413 = scmp.eq.s32.totalorder %s36, 1
      %p414 = scmp.ne.s32.totalorder %s409, %s411
      %p415 = scmp.eq.s32.totalorder %s36, 0
      %p416 = por %p414, %p415
      %p417 = scmp.ne.s32.totalorder %s409, %s411
      %p418 = scmp.eq.s32.totalorder %s41, 1
      %p419 = por %p417, %p418
      %p420 = scmp.ne.s32.totalorder %s411, %s412
      %p421 = scmp.eq.s32.totalorder %s41, 0
      %p422 = por %p420, %p421
      %p423 = scmp.ne.s32.totalorder %s411, %s412
      %p424 = scmp.eq.s32.totalorder %s42, 1
      %p425 = por %p423, %p424
      %p427 = scmp.ne.s32.totalorder %s412, %s426
      %p428 = scmp.eq.s32.totalorder %s42, 0
      %p429 = por %p427, %p428
      %s431 = sadd.s32 %s430, 1
      %p434 = scmp.eq.s32.totalorder %s36, 1
      %p435 = scmp.ne.s32.totalorder %s430, %s432
      %p436 = scmp.eq.s32.totalorder %s36, 0
      %p437 = por %p435, %p436
      %p438 = scmp.ne.s32.totalorder %s430, %s432
      %p439 = scmp.eq.s32.totalorder %s41, 1
      %p440 = por %p438, %p439
      %p441 = scmp.ne.s32.totalorder %s432, %s433
      %p442 = scmp.eq.s32.totalorder %s41, 0
      %p443 = por %p441, %p442
      %p444 = scmp.ne.s32.totalorder %s432, %s433
      %p445 = scmp.eq.s32.totalorder %s42, 1
      %p446 = por %p444, %p445
      %p448 = scmp.ne.s32.totalorder %s433, %s447
      %p449 = scmp.eq.s32.totalorder %s42, 0
      %p450 = por %p448, %p449
      %p451 = scmp.le.s32.totalorder 1, %s36
      %p452 = scmp.lt.s32.totalorder %s36, 3
      %p453 = pnand %p451, %p452
      %p454 = pneg %p453
      // Predicated region
      $region9: #{tpu_custom_call.1} parent=5 // pred_check
        _
      $region10: #{tpu_custom_call.1} parent=5 // pred_check_branch
        %456 = sbr.rel (%p453) target = $region12
      $region11: #{tpu_custom_call.1} parent=5 // pred_region
        %s457 = ssub.s32 %s36, 1
        // Predicated region
        $region13: #{tpu_custom_call.1} parent=11 // pred_check
          %p458 = pneg %p57
        $region14: #{tpu_custom_call.1} parent=11 // pred_check_branch
          %460 = sbr.rel (%p458) target = $region16
        $region15: #{tpu_custom_call.1} parent=11 // pred_region
          _
        $region16: #{tpu_custom_call.1} parent=11 // pred_fallthru
          _
        // Predicated region
        $region17: #{tpu_custom_call.1} parent=11 // pred_check
          %p461 = pneg %p78
        $region18: #{tpu_custom_call.1} parent=11 // pred_check_branch
          %463 = sbr.rel (%p461) target = $region20
        $region19: #{tpu_custom_call.1} parent=11 // pred_region
          %s465 = ssub.s32 256, 256
          %466 = vsyncadd [#allocation4], %s465
          %s467 = sshll.u32 [#allocation3], 4
          %s468 = int_to_ptr.vmem [resolvable:$true] %s467
          %473 = dma.hbm_to_vmem [thread:$0]  %s1, 256, %s468, [#allocation4], 64, 64, 4
        $region20: #{tpu_custom_call.1} parent=11 // pred_fallthru
          _
        // Predicated region
        $region21: #{tpu_custom_call.1} parent=11 // pred_check
          %p474 = pneg %p359
        $region22: #{tpu_custom_call.1} parent=11 // pred_check_branch
          %476 = sbr.rel (%p474) target = $region24
        $region23: #{tpu_custom_call.1} parent=11 // pred_region
          _
        $region24: #{tpu_custom_call.1} parent=11 // pred_fallthru
          _
        // Predicated region
        $region25: #{tpu_custom_call.1} parent=11 // pred_check
          %p477 = pneg %p380
        $region26: #{tpu_custom_call.1} parent=11 // pred_check_branch
          %479 = sbr.rel (%p477) target = $region28
        $region27: #{tpu_custom_call.1} parent=11 // pred_region
          _
        $region28: #{tpu_custom_call.1} parent=11 // pred_fallthru
          _
        // Predicated region
        $region29: #{tpu_custom_call.1} parent=11 // pred_check
          %p480 = pneg %p401
        $region30: #{tpu_custom_call.1} parent=11 // pred_check_branch
          %482 = sbr.rel (%p480) target = $region32
        $region31: #{tpu_custom_call.1} parent=11 // pred_region
          _
        $region32: #{tpu_custom_call.1} parent=11 // pred_fallthru
          _
        // Predicated region
        $region33: #{tpu_custom_call.1} parent=11 // pred_check
          %p483 = pneg %p422
        $region34: #{tpu_custom_call.1} parent=11 // pred_check_branch
          %485 = sbr.rel (%p483) target = $region36
        $region35: #{tpu_custom_call.1} parent=11 // pred_region
          _
        $region36: #{tpu_custom_call.1} parent=11 // pred_fallthru
          _
      $region12: #{tpu_custom_call.1} parent=5 // pred_fallthru
        _
      %p486 = scmp.lt.s32.totalorder %s36, 2
      // Predicated region
      $region37: #{tpu_custom_call.1} parent=5 // pred_check
        %p487 = pneg %p486
      $region38: #{tpu_custom_call.1} parent=5 // pred_check_branch
        %489 = sbr.rel (%p487) target = $region40
      $region39: #{tpu_custom_call.1} parent=5 // pred_region
        // Predicated region
        $region41: #{tpu_custom_call.1} parent=39 // pred_check
          %p490 = pneg %p98
        $region42: #{tpu_custom_call.1} parent=39 // pred_check_branch
          %492 = sbr.rel (%p490) target = $region44
        $region43: #{tpu_custom_call.1} parent=39 // pred_region
          %s493 = sand.u32 %s36, 1
          %s494 = scalar_lea.sflag [#allocation7], %s493
          %s495 = sand.u32 %s88, 1
          %s496 = smul.addr %s495, 16
          %s497 = scalar_lea.vmem [#allocation6], %s496
          %s499 = ssub.s32 256, 256
          %500 = vsyncadd %s494, %s499
          %s501 = smul.addr %s36, 4
          %s502 = smul.addr %s501, 64
          %s503 = scalar_lea.hbm %s2, %s502
          %s504 = sshll.u32 %s497, 4
          %s505 = int_to_ptr.vmem [resolvable:$true] %s504
          %510 = dma.hbm_to_vmem [thread:$0]  %s503, 256, %s505, %s494, 64, 64, 4
        $region44: #{tpu_custom_call.1} parent=39 // pred_fallthru
          _
        // Predicated region
        $region45: #{tpu_custom_call.1} parent=39 // pred_check
          %p511 = pneg %p124
        $region46: #{tpu_custom_call.1} parent=39 // pred_check_branch
          %513 = sbr.rel (%p511) target = $region48
        $region47: #{tpu_custom_call.1} parent=39 // pred_region
          %s514 = sand.u32 %s36, 1
          %s515 = scalar_lea.sflag [#allocation7], %s514
          %s516 = sand.u32 %s114, 1
          %s517 = scalar_lea.vmem [#allocation8], %s516
          %s519 = ssub.s32 16, 16
          %520 = vsyncadd %s515, %s519
          %s521 = smul.addr %s36, 16
          %s522 = scalar_lea.hbm %s3, %s521
          %s524 = sshll.u32 %s517, 4
          %s525 = int_to_ptr.vmem [resolvable:$true] %s524
          %527 = dma.hbm_to_vmem [thread:$0]  %s522, 16, %s525, %s515
        $region48: #{tpu_custom_call.1} parent=39 // pred_fallthru
          _
        // Predicated region
        $region49: #{tpu_custom_call.1} parent=39 // pred_check
          %p528 = pneg %p150
        $region50: #{tpu_custom_call.1} parent=39 // pred_check_branch
          %530 = sbr.rel (%p528) target = $region52
        $region51: #{tpu_custom_call.1} parent=39 // pred_region
          %s531 = sand.u32 %s36, 1
          %s532 = scalar_lea.sflag [#allocation10], %s531
          %s533 = sand.u32 %s140, 1
          %s534 = smul.addr %s533, 16
          %s535 = scalar_lea.vmem [#allocation9], %s534
          %s537 = ssub.s32 256, 256
          %538 = vsyncadd %s532, %s537
          %s539 = smul.addr %s36, 4
          %s540 = smul.addr %s539, 64
          %s541 = scalar_lea.hbm %s4, %s540
          %s542 = sshll.u32 %s535, 4
          %s543 = int_to_ptr.vmem [resolvable:$true] %s542
          %548 = dma.hbm_to_vmem [thread:$0]  %s541, 256, %s543, %s532, 64, 64, 4
        $region52: #{tpu_custom_call.1} parent=39 // pred_fallthru
          _
        // Predicated region
        $region53: #{tpu_custom_call.1} parent=39 // pred_check
          %p549 = pneg %p176
        $region54: #{tpu_custom_call.1} parent=39 // pred_check_branch
          %551 = sbr.rel (%p549) target = $region56
        $region55: #{tpu_custom_call.1} parent=39 // pred_region
          %s552 = sand.u32 %s36, 1
          %s553 = scalar_lea.sflag [#allocation10], %s552
          %s554 = sand.u32 %s166, 1
          %s555 = scalar_lea.vmem [#allocation11], %s554
          %s557 = ssub.s32 16, 16
          %558 = vsyncadd %s553, %s557
          %s559 = smul.addr %s36, 16
          %s560 = scalar_lea.hbm %s5, %s559
          %s562 = sshll.u32 %s555, 4
          %s563 = int_to_ptr.vmem [resolvable:$true] %s562
          %565 = dma.hbm_to_vmem [thread:$0]  %s560, 16, %s563, %s553
        $region56: #{tpu_custom_call.1} parent=39 // pred_fallthru
          _
        // Predicated region
        $region57: #{tpu_custom_call.1} parent=39 // pred_check
          %p566 = pneg %p202
        $region58: #{tpu_custom_call.1} parent=39 // pred_check_branch
          %568 = sbr.rel (%p566) target = $region60
        $region59: #{tpu_custom_call.1} parent=39 // pred_region
          %s569 = sand.u32 %s36, 1
          %s570 = scalar_lea.sflag [#allocation13], %s569
          %s571 = sand.u32 %s192, 1
          %s572 = smul.addr %s571, 16
          %s573 = scalar_lea.vmem [#allocation12], %s572
          %s575 = ssub.s32 256, 256
          %576 = vsyncadd %s570, %s575
          %s577 = smul.addr %s36, 4
          %s578 = smul.addr %s577, 64
          %s579 = scalar_lea.hbm %s6, %s578
          %s580 = sshll.u32 %s573, 4
          %s581 = int_to_ptr.vmem [resolvable:$true] %s580
          %586 = dma.hbm_to_vmem [thread:$0]  %s579, 256, %s581, %s570, 64, 64, 4
        $region60: #{tpu_custom_call.1} parent=39 // pred_fallthru
          _
        // Predicated region
        $region61: #{tpu_custom_call.1} parent=39 // pred_check
          %p587 = pneg %p228
        $region62: #{tpu_custom_call.1} parent=39 // pred_check_branch
          %589 = sbr.rel (%p587) target = $region64
        $region63: #{tpu_custom_call.1} parent=39 // pred_region
          %s590 = sand.u32 %s36, 1
          %s591 = scalar_lea.sflag [#allocation13], %s590
          %s592 = sand.u32 %s218, 1
          %s593 = scalar_lea.vmem [#allocation14], %s592
          %s595 = ssub.s32 16, 16
          %596 = vsyncadd %s591, %s595
          %s597 = smul.addr %s36, 16
          %s598 = scalar_lea.hbm %s7, %s597
          %s600 = sshll.u32 %s593, 4
          %s601 = int_to_ptr.vmem [resolvable:$true] %s600
          %603 = dma.hbm_to_vmem [thread:$0]  %s598, 16, %s601, %s591
        $region64: #{tpu_custom_call.1} parent=39 // pred_fallthru
          _
        // Predicated region
        $region65: #{tpu_custom_call.1} parent=39 // pred_check
          %p604 = pneg %p254
        $region66: #{tpu_custom_call.1} parent=39 // pred_check_branch
          %606 = sbr.rel (%p604) target = $region68
        $region67: #{tpu_custom_call.1} parent=39 // pred_region
          %s607 = sand.u32 %s36, 1
          %s608 = scalar_lea.sflag [#allocation16], %s607
          %s609 = sand.u32 %s244, 1
          %s610 = scalar_lea.vmem [#allocation15], %s609
          %s612 = ssub.s32 16, 16
          %613 = vsyncadd %s608, %s612
          %s614 = smul.addr %s36, 16
          %s615 = scalar_lea.hbm %s8, %s614
          %s617 = sshll.u32 %s610, 4
          %s618 = int_to_ptr.vmem [resolvable:$true] %s617
          %620 = dma.hbm_to_vmem [thread:$0]  %s615, 16, %s618, %s608
        $region68: #{tpu_custom_call.1} parent=39 // pred_fallthru
          _
        // Predicated region
        $region69: #{tpu_custom_call.1} parent=39 // pred_check
          %p621 = pneg %p280
        $region70: #{tpu_custom_call.1} parent=39 // pred_check_branch
          %623 = sbr.rel (%p621) target = $region72
        $region71: #{tpu_custom_call.1} parent=39 // pred_region
          %s624 = sand.u32 %s36, 1
          %s625 = scalar_lea.sflag [#allocation16], %s624
          %s626 = sand.u32 %s270, 1
          %s627 = scalar_lea.vmem [#allocation17], %s626
          %s629 = ssub.s32 16, 16
          %630 = vsyncadd %s625, %s629
          %s631 = smul.addr %s36, 16
          %s632 = scalar_lea.hbm %s9, %s631
          %s634 = sshll.u32 %s627, 4
          %s635 = int_to_ptr.vmem [resolvable:$true] %s634
          %637 = dma.hbm_to_vmem [thread:$0]  %s632, 16, %s635, %s625
        $region72: #{tpu_custom_call.1} parent=39 // pred_fallthru
          _
        // Predicated region
        $region73: #{tpu_custom_call.1} parent=39 // pred_check
          %p638 = pneg %p306
        $region74: #{tpu_custom_call.1} parent=39 // pred_check_branch
          %640 = sbr.rel (%p638) target = $region76
        $region75: #{tpu_custom_call.1} parent=39 // pred_region
          %p641 = scmp.lt.s32.totalorder %s36, 1
          %s642 = scalar_select %p641, %s36, 1
          %s643 = scalar_lea.vmem %s10, %s642
        $region76: #{tpu_custom_call.1} parent=39 // pred_fallthru
          _
        // Predicated region
        $region77: #{tpu_custom_call.1} parent=39 // pred_check
          %p644 = pneg %p332
        $region78: #{tpu_custom_call.1} parent=39 // pred_check_branch
          %646 = sbr.rel (%p644) target = $region80
        $region79: #{tpu_custom_call.1} parent=39 // pred_region
          %p647 = scmp.lt.s32.totalorder %s36, 1
          %s648 = scalar_select %p647, %s36, 1
          %s649 = scalar_lea.vmem %s11, %s648
        $region80: #{tpu_custom_call.1} parent=39 // pred_fallthru
          _
      $region40: #{tpu_custom_call.1} parent=5 // pred_fallthru
        _
      %p650 = scmp.le.s32.totalorder 1, %s36
      %p651 = scmp.lt.s32.totalorder %s36, 3
      %p652 = pnand %p650, %p651
      %p653 = pneg %p652
      // Predicated region
      $region81: #{tpu_custom_call.1} parent=5 // pred_check
        _
      $region82: #{tpu_custom_call.1} parent=5 // pred_check_branch
        %655 = sbr.rel (%p652) target = $region84
      $region83: #{tpu_custom_call.1} parent=5 // pred_region
        %s656 = ssub.s32 %s36, 1
        // Predicated region
        $region85: #{tpu_custom_call.1} parent=83 // pred_check
          %p657 = pneg %p78
        $region86: #{tpu_custom_call.1} parent=83 // pred_check_branch
          %659 = sbr.rel (%p657) target = $region88
        $region87: #{tpu_custom_call.1} parent=83 // pred_region
          %660 = dma.done [#allocation4], 256
        $region88: #{tpu_custom_call.1} parent=83 // pred_fallthru
          _
        %s661 = sand.u32 %s41, 1
        %s662 = scalar_lea.sflag [#allocation7], %s661
        %s663 = sand.u32 %s91, 1
        %s664 = smul.addr %s663, 16
        %s665 = scalar_lea.vmem [#allocation6], %s664
        // Predicated region
        $region89: #{tpu_custom_call.1} parent=83 // pred_check
          %p666 = pneg %p104
        $region90: #{tpu_custom_call.1} parent=83 // pred_check_branch
          %668 = sbr.rel (%p666) target = $region92
        $region91: #{tpu_custom_call.1} parent=83 // pred_region
          %669 = dma.done %s662, 256
        $region92: #{tpu_custom_call.1} parent=83 // pred_fallthru
          _
        %s670 = sand.u32 %s41, 1
        %s671 = scalar_lea.sflag [#allocation7], %s670
        %s672 = sand.u32 %s117, 1
        %s673 = scalar_lea.vmem [#allocation8], %s672
        // Predicated region
        $region93: #{tpu_custom_call.1} parent=83 // pred_check
          %p674 = pneg %p130
        $region94: #{tpu_custom_call.1} parent=83 // pred_check_branch
          %676 = sbr.rel (%p674) target = $region96
        $region95: #{tpu_custom_call.1} parent=83 // pred_region
          %677 = dma.done %s671, 16
        $region96: #{tpu_custom_call.1} parent=83 // pred_fallthru
          _
        %s678 = sand.u32 %s41, 1
        %s679 = scalar_lea.sflag [#allocation10], %s678
        %s680 = sand.u32 %s143, 1
        %s681 = smul.addr %s680, 16
        %s682 = scalar_lea.vmem [#allocation9], %s681
        // Predicated region
        $region97: #{tpu_custom_call.1} parent=83 // pred_check
          %p683 = pneg %p156
        $region98: #{tpu_custom_call.1} parent=83 // pred_check_branch
          %685 = sbr.rel (%p683) target = $region100
        $region99: #{tpu_custom_call.1} parent=83 // pred_region
          %686 = dma.done %s679, 256
        $region100: #{tpu_custom_call.1} parent=83 // pred_fallthru
          _
        %s687 = sand.u32 %s41, 1
        %s688 = scalar_lea.sflag [#allocation10], %s687
        %s689 = sand.u32 %s169, 1
        %s690 = scalar_lea.vmem [#allocation11], %s689
        // Predicated region
        $region101: #{tpu_custom_call.1} parent=83 // pred_check
          %p691 = pneg %p182
        $region102: #{tpu_custom_call.1} parent=83 // pred_check_branch
          %693 = sbr.rel (%p691) target = $region104
        $region103: #{tpu_custom_call.1} parent=83 // pred_region
          %694 = dma.done %s688, 16
        $region104: #{tpu_custom_call.1} parent=83 // pred_fallthru
          _
        %s695 = sand.u32 %s41, 1
        %s696 = scalar_lea.sflag [#allocation13], %s695
        %s697 = sand.u32 %s195, 1
        %s698 = smul.addr %s697, 16
        %s699 = scalar_lea.vmem [#allocation12], %s698
        // Predicated region
        $region105: #{tpu_custom_call.1} parent=83 // pred_check
          %p700 = pneg %p208
        $region106: #{tpu_custom_call.1} parent=83 // pred_check_branch
          %702 = sbr.rel (%p700) target = $region108
        $region107: #{tpu_custom_call.1} parent=83 // pred_region
          %703 = dma.done %s696, 256
        $region108: #{tpu_custom_call.1} parent=83 // pred_fallthru
          _
        %s704 = sand.u32 %s41, 1
        %s705 = scalar_lea.sflag [#allocation13], %s704
        %s706 = sand.u32 %s221, 1
        %s707 = scalar_lea.vmem [#allocation14], %s706
        // Predicated region
        $region109: #{tpu_custom_call.1} parent=83 // pred_check
          %p708 = pneg %p234
        $region110: #{tpu_custom_call.1} parent=83 // pred_check_branch
          %710 = sbr.rel (%p708) target = $region112
        $region111: #{tpu_custom_call.1} parent=83 // pred_region
          %711 = dma.done %s705, 16
        $region112: #{tpu_custom_call.1} parent=83 // pred_fallthru
          _
        %s712 = sand.u32 %s41, 1
        %s713 = scalar_lea.sflag [#allocation16], %s712
        %s714 = sand.u32 %s247, 1
        %s715 = scalar_lea.vmem [#allocation15], %s714
        // Predicated region
        $region113: #{tpu_custom_call.1} parent=83 // pred_check
          %p716 = pneg %p260
        $region114: #{tpu_custom_call.1} parent=83 // pred_check_branch
          %718 = sbr.rel (%p716) target = $region116
        $region115: #{tpu_custom_call.1} parent=83 // pred_region
          %719 = dma.done %s713, 16
        $region116: #{tpu_custom_call.1} parent=83 // pred_fallthru
          _
        %s720 = sand.u32 %s41, 1
        %s721 = scalar_lea.sflag [#allocation16], %s720
        %s722 = sand.u32 %s273, 1
        %s723 = scalar_lea.vmem [#allocation17], %s722
        // Predicated region
        $region117: #{tpu_custom_call.1} parent=83 // pred_check
          %p724 = pneg %p286
        $region118: #{tpu_custom_call.1} parent=83 // pred_check_branch
          %726 = sbr.rel (%p724) target = $region120
        $region119: #{tpu_custom_call.1} parent=83 // pred_region
          %727 = dma.done %s721, 16
        $region120: #{tpu_custom_call.1} parent=83 // pred_fallthru
          _
        %p728 = pneg %p57
        %p729 = pneg %p54
        %p730 = pneg %p78
        %p731 = pneg %p75
        %s732 = sand.u32 %s41, 1
        %s733 = scalar_lea.sflag [#allocation7], %s732
        %s734 = sand.u32 %s91, 1
        %s735 = smul.addr %s734, 16
        %s736 = scalar_lea.vmem [#allocation6], %s735
        %p737 = pneg %p104
        %p738 = pneg %p101
        %s739 = sand.u32 %s41, 1
        %s740 = scalar_lea.sflag [#allocation7], %s739
        %s741 = sand.u32 %s117, 1
        %s742 = scalar_lea.vmem [#allocation8], %s741
        %p743 = pneg %p130
        %p744 = pneg %p127
        %s745 = sand.u32 %s41, 1
        %s746 = scalar_lea.sflag [#allocation10], %s745
        %s747 = sand.u32 %s143, 1
        %s748 = smul.addr %s747, 16
        %s749 = scalar_lea.vmem [#allocation9], %s748
        %p750 = pneg %p156
        %p751 = pneg %p153
        %s752 = sand.u32 %s41, 1
        %s753 = scalar_lea.sflag [#allocation10], %s752
        %s754 = sand.u32 %s169, 1
        %s755 = scalar_lea.vmem [#allocation11], %s754
        %p756 = pneg %p182
        %p757 = pneg %p179
        %s758 = sand.u32 %s41, 1
        %s759 = scalar_lea.sflag [#allocation13], %s758
        %s760 = sand.u32 %s195, 1
        %s761 = smul.addr %s760, 16
        %s762 = scalar_lea.vmem [#allocation12], %s761
        %p763 = pneg %p208
        %p764 = pneg %p205
        %s765 = sand.u32 %s41, 1
        %s766 = scalar_lea.sflag [#allocation13], %s765
        %s767 = sand.u32 %s221, 1
        %s768 = scalar_lea.vmem [#allocation14], %s767
        %p769 = pneg %p234
        %p770 = pneg %p231
        %s771 = sand.u32 %s41, 1
        %s772 = scalar_lea.sflag [#allocation16], %s771
        %s773 = sand.u32 %s247, 1
        %s774 = scalar_lea.vmem [#allocation15], %s773
        %p775 = pneg %p260
        %p776 = pneg %p257
        %s777 = sand.u32 %s41, 1
        %s778 = scalar_lea.sflag [#allocation16], %s777
        %s779 = sand.u32 %s273, 1
        %s780 = scalar_lea.vmem [#allocation17], %s779
        %p781 = pneg %p286
        %p782 = pneg %p283
        %p783 = scmp.lt.s32.totalorder %s41, 1
        %s784 = scalar_select %p783, %s41, 1
        %s785 = scalar_lea.vmem %s10, %s784
        %p786 = pneg %p312
        %p787 = pneg %p309
        %p788 = scmp.lt.s32.totalorder %s41, 1
        %s789 = scalar_select %p788, %s41, 1
        %s790 = scalar_lea.vmem %s11, %s789
        %p791 = pneg %p338
        %p792 = pneg %p335
        %p793 = pneg %p359
        %p794 = pneg %p356
        %p795 = pneg %p380
        %p796 = pneg %p377
        %p797 = pneg %p401
        %p798 = pneg %p398
        %p799 = pneg %p422
        %p800 = pneg %p419
        %p801 = pneg %p443
        %p802 = pneg %p440
        %p803 = scmp.lt.s32.totalorder %s41, 1
        %s804 = scalar_select %p803, %s41, 1
        %s805 = scalar_lea.vmem %s10, %s804
        %p806 = scmp.lt.s32.totalorder %s41, 1
        %s807 = scalar_select %p806, %s41, 1
        %s808 = scalar_lea.vmem %s11, %s807
        %p810 = scmp.eq.s32.totalorder %s41, 0
        // Predicated region
        $region121: #{tpu_custom_call.1} parent=83 // pred_check
          %p811 = pneg %p810
        $region122: #{tpu_custom_call.1} parent=83 // pred_check_branch
          %813 = sbr.rel (%p811) target = $region124
        $region123: #{tpu_custom_call.1} parent=83 // pred_region
          %v814 = vld [vmem:[%s0] sm:$0xff]
          %v815 = vld [vmem:[%s0 + $0x8] sm:$0xff]
          %v816 = vpack.c.bf16 %v815, %v814
          %v817 = vld [vmem:[#allocation3] sm:$0xf]
          %v818 = vld [vmem:[#allocation3 + $0x4] sm:$0xf]
          %v819 = vld [vmem:[#allocation3 + $0x8] sm:$0xf]
          %v820 = vld [vmem:[#allocation3 + $0xc] sm:$0xf]
          %v825 = vunpack.c.l.b16 %v817
          %v826 = vunpack.c.l.b16 %v818
          %v827 = vunpack.c.l.b16 %v819
          %v828 = vunpack.c.l.b16 %v820
          %v829 = vpack.c.b16 %v826, %v825
          %v830 = vpack.c.b16 %v828, %v827
          %vm833 = vcmask 261120
          %v835 = vsel %vm833, %v816, 0
          %837 = vmatprep.subr.bf16.mxu0 0
          %838 = vmatpush1.bf16.msra.mxu0 0
          %839 = vmatprep.subr.bf16.mxu0 0
          %840 = vmatpush1.bf16.msra.mxu0 0
          %841 = vmatprep.subr.bf16.mxu0 0
          %842 = vmatpush1.bf16.msra.mxu0 0
          %843 = vmatprep.subr.bf16.mxu0 0
          %844 = vmatpush1.bf16.msra.mxu0 0
          %845 = vmatprep.subr.bf16.mxu0 0
          %846 = vmatpush1.bf16.msra.mxu0 0
          %847 = vmatprep.subr.bf16.mxu0 0
          %848 = vmatpush1.bf16.msra.mxu0 0
          %849 = vmatprep.subr.bf16.mxu0 0
          %850 = vmatpush1.bf16.msra.mxu0 %v830
          %851 = vmatprep.subr.bf16.mxu0 0
          %852 = vmatpush1.bf16.msra.mxu0 %v829
          %853 = vmatprep.subr.bf16.mxu0 0
          %854 = vmatpush2.bf16.msra.mxu0 0
          %855 = vmatprep.subr.bf16.mxu0 0
          %856 = vmatpush2.bf16.msra.mxu0 0
          %857 = vmatprep.subr.bf16.mxu0 0
          %858 = vmatpush2.bf16.msra.mxu0 0
          %859 = vmatprep.subr.bf16.mxu0 0
          %860 = vmatpush2.bf16.msra.mxu0 0
          %861 = vmatprep.subr.bf16.mxu0 0
          %862 = vmatpush2.bf16.msra.mxu0 0
          %863 = vmatprep.subr.bf16.mxu0 0
          %864 = vmatpush2.bf16.msra.mxu0 0
          %865 = vmatprep.subr.bf16.mxu0 0
          %866 = vmatpush2.bf16.msra.mxu0 0
          %867 = vmatprep.subr.bf16.mxu0 0
          %868 = vmatpush2.bf16.msra.mxu0 0
          %869 = vmatprep.mubr.bf16.mxu0 0
          %870 = vmatmul.mubr.bf16.gmra.mxu0 %v835
          %v871 = vpop.f32.mrf.mxu0
          %v872 = vadd.f32 0.0, %v871
          %v873 = vpop.f32.mrf.mxu0
          %v874 = vpop.f32.mrf.mxu0
          %v875 = vadd.f32 0.0, %v874
          %v876 = vpop.f32.mrf.mxu0
          %877 = vdwg.mxu0
          %878 = vst.msk [vmem:[#allocation2] sm:$0xff] %vm833, %v872
          %879 = vst.msk [vmem:[#allocation2 + $0x8] sm:$0xff] %vm833, %v875
        $region124: #{tpu_custom_call.1} parent=83 // pred_fallthru
          _
        %v880 = vld [vmem:[#allocation2] sm:$0xff]
        %v881 = vld [vmem:[#allocation2 + $0x8] sm:$0xff]
        %v882 = vpack.c.bf16 %v881, %v880
        %v883 = vld [vmem:[%s665] sm:$0xf]
        %v884 = vld [vmem:[%s665 + $0x4] sm:$0xf]
        %v885 = vld [vmem:[%s665 + $0x8] sm:$0xf]
        %v886 = vld [vmem:[%s665 + $0xc] sm:$0xf]
        %v887 = vld [vmem:[%s673] sm:$0x1]
        %v889 = vlaneseq
        %v890 = vshrl.u32 %v889, 7
        %v891 = vsub.s32 0, %v890
        %v892 = vrot.slane %v887, %v891
        %v898 = vunpack.c.l.b16 %v883
        %v899 = vunpack.c.l.b16 %v884
        %v900 = vunpack.c.l.b16 %v885
        %v901 = vunpack.c.l.b16 %v886
        %v902 = vpack.c.b16 %v899, %v898
        %v903 = vpack.c.b16 %v901, %v900
        %vm906 = vcmask 261120
        %v908 = vsel %vm906, %v882, 0
        %910 = vmatprep.subr.bf16.mxu0 0
        %911 = vmatpush1.bf16.msra.mxu0 0
        %912 = vmatprep.subr.bf16.mxu0 0
        %913 = vmatpush1.bf16.msra.mxu0 0
        %914 = vmatprep.subr.bf16.mxu0 0
        %915 = vmatpush1.bf16.msra.mxu0 0
        %916 = vmatprep.subr.bf16.mxu0 0
        %917 = vmatpush1.bf16.msra.mxu0 0
        %918 = vmatprep.subr.bf16.mxu0 0
        %919 = vmatpush1.bf16.msra.mxu0 0
        %920 = vmatprep.subr.bf16.mxu0 0
        %921 = vmatpush1.bf16.msra.mxu0 0
        %922 = vmatprep.subr.bf16.mxu0 0
        %923 = vmatpush1.bf16.msra.mxu0 %v903
        %924 = vmatprep.subr.bf16.mxu0 0
        %925 = vmatpush1.bf16.msra.mxu0 %v902
        %926 = vmatprep.subr.bf16.mxu0 0
        %927 = vmatpush2.bf16.msra.mxu0 0
        %928 = vmatprep.subr.bf16.mxu0 0
        %929 = vmatpush2.bf16.msra.mxu0 0
        %930 = vmatprep.subr.bf16.mxu0 0
        %931 = vmatpush2.bf16.msra.mxu0 0
        %932 = vmatprep.subr.bf16.mxu0 0
        %933 = vmatpush2.bf16.msra.mxu0 0
        %934 = vmatprep.subr.bf16.mxu0 0
        %935 = vmatpush2.bf16.msra.mxu0 0
        %936 = vmatprep.subr.bf16.mxu0 0
        %937 = vmatpush2.bf16.msra.mxu0 0
        %938 = vmatprep.subr.bf16.mxu0 0
        %939 = vmatpush2.bf16.msra.mxu0 0
        %940 = vmatprep.subr.bf16.mxu0 0
        %941 = vmatpush2.bf16.msra.mxu0 0
        %942 = vmatprep.mubr.bf16.mxu0 0
        %943 = vmatmul.mubr.bf16.gmra.mxu0 %v908
        %v944 = vpop.f32.mrf.mxu0
        %v945 = vadd.f32 %v892, %v944
        %v946 = vpop.f32.mrf.mxu0
        %v947 = vpop.f32.mrf.mxu0
        %v948 = vadd.f32 %v892, %v947
        %v949 = vpop.f32.mrf.mxu0
        %950 = vdwg.mxu0
        %v951 = vpack.c.bf16 %v948, %v945
        %v953 = vunpack.c.l.b16 %v951
        %v954 = vunpack.c.h.b16 %v951
        %v955 = vpack.c.b16 %v953, %v953
        %v956 = vpack.c.b16 %v954, %v954
        %957 = vrot.lane.b32.xlu0 %v955, 96
        %v958 = vpop.permute.xlu0 %957
        %vm959 = vcmask 130048
        %v961 = vsel %vm959, %v955, 0
        %v964 = vsel %vm959, %v958, 0
        %966 = vmatprep.subr.bf16.mxu0 0
        %967 = vmatpush1.bf16.xpose.msra.mxu0 0
        %968 = vmatprep.subr.bf16.mxu0 0
        %969 = vmatpush1.bf16.xpose.msra.mxu0 0
        %970 = vmatprep.subr.bf16.mxu0 0
        %971 = vmatpush1.bf16.xpose.msra.mxu0 0
        %972 = vmatprep.subr.bf16.mxu0 0
        %973 = vmatpush1.bf16.xpose.msra.mxu0 0
        %974 = vmatprep.subr.bf16.mxu0 0
        %975 = vmatpush1.bf16.xpose.msra.mxu0 0
        %976 = vmatprep.subr.bf16.mxu0 0
        %977 = vmatpush1.bf16.xpose.msra.mxu0 0
        %978 = vmatprep.subr.bf16.mxu0 0
        %979 = vmatpush1.bf16.xpose.msra.mxu0 0
        %980 = vmatprep.subr.bf16.mxu0 0
        %981 = vmatpush1.bf16.xpose.msra.mxu0 %v964
        %982 = vmatprep.subr.bf16.mxu0 0
        %983 = vmatpush2.bf16.xpose.msra.mxu0 0
        %984 = vmatprep.subr.bf16.mxu0 0
        %985 = vmatpush2.bf16.xpose.msra.mxu0 0
        %986 = vmatprep.subr.bf16.mxu0 0
        %987 = vmatpush2.bf16.xpose.msra.mxu0 0
        %988 = vmatprep.subr.bf16.mxu0 0
        %989 = vmatpush2.bf16.xpose.msra.mxu0 0
        %990 = vmatprep.subr.bf16.mxu0 0
        %991 = vmatpush2.bf16.xpose.msra.mxu0 0
        %992 = vmatprep.subr.bf16.mxu0 0
        %993 = vmatpush2.bf16.xpose.msra.mxu0 0
        %994 = vmatprep.subr.bf16.mxu0 0
        %995 = vmatpush2.bf16.xpose.msra.mxu0 0
        %996 = vmatprep.subr.bf16.mxu0 0
        %997 = vmatpush2.bf16.xpose.msra.mxu0 0
        %998 = vmatprep.mubr.bf16.mxu0 0
        %999 = vmatmul.mubr.bf16.gmra.mxu0 %v961
        %v1000 = vpop.f32.mrf.mxu0
        %v1001 = vadd.f32 0.0, %v1000
        %v1002 = vpop.f32.mrf.mxu0
        %v1003 = vpop.f32.mrf.mxu0
        %v1004 = vpop.f32.mrf.mxu0
        %1005 = vdwg.mxu0
        %1006 = vrot.lane.b32.xlu0 %v956, 96
        %v1007 = vpop.permute.xlu0 %1006
        %v1009 = vsel %vm959, %v956, 0
        %v1012 = vsel %vm959, %v1007, 0
        %1014 = vmatprep.subr.bf16.mxu0 0
        %1015 = vmatpush1.bf16.xpose.msra.mxu0 0
        %1016 = vmatprep.subr.bf16.mxu0 0
        %1017 = vmatpush1.bf16.xpose.msra.mxu0 0
        %1018 = vmatprep.subr.bf16.mxu0 0
        %1019 = vmatpush1.bf16.xpose.msra.mxu0 0
        %1020 = vmatprep.subr.bf16.mxu0 0
        %1021 = vmatpush1.bf16.xpose.msra.mxu0 0
        %1022 = vmatprep.subr.bf16.mxu0 0
        %1023 = vmatpush1.bf16.xpose.msra.mxu0 0
        %1024 = vmatprep.subr.bf16.mxu0 0
        %1025 = vmatpush1.bf16.xpose.msra.mxu0 0
        %1026 = vmatprep.subr.bf16.mxu0 0
        %1027 = vmatpush1.bf16.xpose.msra.mxu0 0
        %1028 = vmatprep.subr.bf16.mxu0 0
        %1029 = vmatpush1.bf16.xpose.msra.mxu0 %v1012
        %1030 = vmatprep.subr.bf16.mxu0 0
        %1031 = vmatpush2.bf16.xpose.msra.mxu0 0
        %1032 = vmatprep.subr.bf16.mxu0 0
        %1033 = vmatpush2.bf16.xpose.msra.mxu0 0
        %1034 = vmatprep.subr.bf16.mxu0 0
        %1035 = vmatpush2.bf16.xpose.msra.mxu0 0
        %1036 = vmatprep.subr.bf16.mxu0 0
        %1037 = vmatpush2.bf16.xpose.msra.mxu0 0
        %1038 = vmatprep.subr.bf16.mxu0 0
        %1039 = vmatpush2.bf16.xpose.msra.mxu0 0
        %1040 = vmatprep.subr.bf16.mxu0 0
        %1041 = vmatpush2.bf16.xpose.msra.mxu0 0
        %1042 = vmatprep.subr.bf16.mxu0 0
        %1043 = vmatpush2.bf16.xpose.msra.mxu0 0
        %1044 = vmatprep.subr.bf16.mxu0 0
        %1045 = vmatpush2.bf16.xpose.msra.mxu0 0
        %1046 = vmatprep.mubr.bf16.mxu0 0
        %1047 = vmatmul.mubr.bf16.gmra.mxu0 %v1009
        %v1048 = vpop.f32.mrf.mxu0
        %v1049 = vadd.f32 0.0, %v1048
        %v1050 = vpop.f32.mrf.mxu0
        %v1051 = vpop.f32.mrf.mxu0
        %v1052 = vpop.f32.mrf.mxu0
        %1053 = vdwg.mxu0
        %vm1054 = vcmask 64512
        %v1055 = vsel %vm1054, %v1001, -inf
        %1056 = vmax.xlane.f32.xlu0 %v1055
        %v1057 = vpop.xlane.xlu0 %1056
        %v1058 = vsel %vm1054, %v1049, -inf
        %1059 = vmax.xlane.f32.xlu0 %v1058
        %v1060 = vpop.xlane.xlu0 %1059
        %v1061 = vsub.f32 %v1001, %v1057
        %v1062 = vsub.f32 %v1049, %v1060
        %v1063 = vmul.f32 %v1061, 1.442695
        %v1064 = vpow.pop %v1063
        %v1065 = vmul.f32 %v1062, 1.442695
        %v1066 = vpow.pop %v1065
        %v1067 = vsel %vm1054, %v1064, 0.0
        %1068 = vadd.xlane.f32.xlu0 %v1067
        %v1069 = vpop.xlane.xlu0 %1068
        %v1070 = vsel %vm1054, %v1066, 0.0
        %1071 = vadd.xlane.f32.xlu0 %v1070
        %v1072 = vpop.xlane.xlu0 %1071
        %v1073 = vrcp.pop %v1069
        %v1074 = vrcp.pop %v1072
        %v1075 = vmul.f32 %v1064, %v1073
        %v1076 = vmul.f32 %v1066, %v1074
        %v1077 = vpack.c.bf16 %v1075, %v1075
        %v1078 = vpack.c.bf16 %v1076, %v1076
        %1079 = vrot.lane.b32.xlu0 %v955, 64
        %v1080 = vpop.permute.xlu0 %1079
        %v1082 = vsel %vm1054, %v1077, 0
        %vm1084 = vcmask 1043456
        %v1086 = vsel %vm1084, %v1080, 0
        %1088 = vmatprep.subr.bf16.mxu0 0
        %1089 = vmatpush1.bf16.msra.mxu0 0
        %1090 = vmatprep.subr.bf16.mxu0 0
        %1091 = vmatpush1.bf16.msra.mxu0 0
        %1092 = vmatprep.subr.bf16.mxu0 0
        %1093 = vmatpush1.bf16.msra.mxu0 0
        %1094 = vmatprep.subr.bf16.mxu0 0
        %1095 = vmatpush1.bf16.msra.mxu0 0
        %1096 = vmatprep.subr.bf16.mxu0 0
        %1097 = vmatpush1.bf16.msra.mxu0 0
        %1098 = vmatprep.subr.bf16.mxu0 0
        %1099 = vmatpush1.bf16.msra.mxu0 0
        %1100 = vmatprep.subr.bf16.mxu0 0
        %1101 = vmatpush1.bf16.msra.mxu0 0
        %1102 = vmatprep.subr.bf16.mxu0 0
        %1103 = vmatpush1.bf16.msra.mxu0 %v1086
        %1104 = vmatprep.subr.bf16.mxu0 0
        %1105 = vmatpush2.bf16.msra.mxu0 0
        %1106 = vmatprep.subr.bf16.mxu0 0
        %1107 = vmatpush2.bf16.msra.mxu0 0
        %1108 = vmatprep.subr.bf16.mxu0 0
        %1109 = vmatpush2.bf16.msra.mxu0 0
        %1110 = vmatprep.subr.bf16.mxu0 0
        %1111 = vmatpush2.bf16.msra.mxu0 0
        %1112 = vmatprep.subr.bf16.mxu0 0
        %1113 = vmatpush2.bf16.msra.mxu0 0
        %1114 = vmatprep.subr.bf16.mxu0 0
        %1115 = vmatpush2.bf16.msra.mxu0 0
        %1116 = vmatprep.subr.bf16.mxu0 0
        %1117 = vmatpush2.bf16.msra.mxu0 0
        %1118 = vmatprep.subr.bf16.mxu0 0
        %1119 = vmatpush2.bf16.msra.mxu0 0
        %1120 = vmatprep.mubr.bf16.mxu0 0
        %1121 = vmatmul.mubr.bf16.gmra.mxu0 %v1082
        %v1122 = vpop.f32.mrf.mxu0
        %v1123 = vadd.f32 0.0, %v1122
        %v1124 = vpop.f32.mrf.mxu0
        %v1125 = vpop.f32.mrf.mxu0
        %v1126 = vpop.f32.mrf.mxu0
        %1127 = vdwg.mxu0
        %1128 = vrot.lane.b32.xlu0 %v956, 64
        %v1129 = vpop.permute.xlu0 %1128
        %v1131 = vsel %vm1054, %v1078, 0
        %v1134 = vsel %vm1084, %v1129, 0
        %1136 = vmatprep.subr.bf16.mxu0 0
        %1137 = vmatpush1.bf16.msra.mxu0 0
        %1138 = vmatprep.subr.bf16.mxu0 0
        %1139 = vmatpush1.bf16.msra.mxu0 0
        %1140 = vmatprep.subr.bf16.mxu0 0
        %1141 = vmatpush1.bf16.msra.mxu0 0
        %1142 = vmatprep.subr.bf16.mxu0 0
        %1143 = vmatpush1.bf16.msra.mxu0 0
        %1144 = vmatprep.subr.bf16.mxu0 0
        %1145 = vmatpush1.bf16.msra.mxu0 0
        %1146 = vmatprep.subr.bf16.mxu0 0
        %1147 = vmatpush1.bf16.msra.mxu0 0
        %1148 = vmatprep.subr.bf16.mxu0 0
        %1149 = vmatpush1.bf16.msra.mxu0 0
        %1150 = vmatprep.subr.bf16.mxu0 0
        %1151 = vmatpush1.bf16.msra.mxu0 %v1134
        %1152 = vmatprep.subr.bf16.mxu0 0
        %1153 = vmatpush2.bf16.msra.mxu0 0
        %1154 = vmatprep.subr.bf16.mxu0 0
        %1155 = vmatpush2.bf16.msra.mxu0 0
        %1156 = vmatprep.subr.bf16.mxu0 0
        %1157 = vmatpush2.bf16.msra.mxu0 0
        %1158 = vmatprep.subr.bf16.mxu0 0
        %1159 = vmatpush2.bf16.msra.mxu0 0
        %1160 = vmatprep.subr.bf16.mxu0 0
        %1161 = vmatpush2.bf16.msra.mxu0 0
        %1162 = vmatprep.subr.bf16.mxu0 0
        %1163 = vmatpush2.bf16.msra.mxu0 0
        %1164 = vmatprep.subr.bf16.mxu0 0
        %1165 = vmatpush2.bf16.msra.mxu0 0
        %1166 = vmatprep.subr.bf16.mxu0 0
        %1167 = vmatpush2.bf16.msra.mxu0 0
        %1168 = vmatprep.mubr.bf16.mxu0 0
        %1169 = vmatmul.mubr.bf16.gmra.mxu0 %v1131
        %v1170 = vpop.f32.mrf.mxu0
        %v1171 = vadd.f32 0.0, %v1170
        %v1172 = vpop.f32.mrf.mxu0
        %v1173 = vpop.f32.mrf.mxu0
        %v1174 = vpop.f32.mrf.mxu0
        %1175 = vdwg.mxu0
        %1176 = vrot.lane.b32.xlu0 %v955, 112
        %v1177 = vpop.permute.xlu0 %1176
        %1178 = vrot.lane.b32.xlu0 %v955, 80
        %v1179 = vpop.permute.xlu0 %1178
        %v1181 = vsel %vm959, %v1177, 0
        %v1184 = vsel %vm959, %v1179, 0
        %1186 = vmatprep.subr.bf16.mxu0 0
        %1187 = vmatpush1.bf16.xpose.msra.mxu0 0
        %1188 = vmatprep.subr.bf16.mxu0 0
        %1189 = vmatpush1.bf16.xpose.msra.mxu0 0
        %1190 = vmatprep.subr.bf16.mxu0 0
        %1191 = vmatpush1.bf16.xpose.msra.mxu0 0
        %1192 = vmatprep.subr.bf16.mxu0 0
        %1193 = vmatpush1.bf16.xpose.msra.mxu0 0
        %1194 = vmatprep.subr.bf16.mxu0 0
        %1195 = vmatpush1.bf16.xpose.msra.mxu0 0
        %1196 = vmatprep.subr.bf16.mxu0 0
        %1197 = vmatpush1.bf16.xpose.msra.mxu0 0
        %1198 = vmatprep.subr.bf16.mxu0 0
        %1199 = vmatpush1.bf16.xpose.msra.mxu0 0
        %1200 = vmatprep.subr.bf16.mxu0 0
        %1201 = vmatpush1.bf16.xpose.msra.mxu0 %v1184
        %1202 = vmatprep.subr.bf16.mxu0 0
        %1203 = vmatpush2.bf16.xpose.msra.mxu0 0
        %1204 = vmatprep.subr.bf16.mxu0 0
        %1205 = vmatpush2.bf16.xpose.msra.mxu0 0
        %1206 = vmatprep.subr.bf16.mxu0 0
        %1207 = vmatpush2.bf16.xpose.msra.mxu0 0
        %1208 = vmatprep.subr.bf16.mxu0 0
        %1209 = vmatpush2.bf16.xpose.msra.mxu0 0
        %1210 = vmatprep.subr.bf16.mxu0 0
        %1211 = vmatpush2.bf16.xpose.msra.mxu0 0
        %1212 = vmatprep.subr.bf16.mxu0 0
        %1213 = vmatpush2.bf16.xpose.msra.mxu0 0
        %1214 = vmatprep.subr.bf16.mxu0 0
        %1215 = vmatpush2.bf16.xpose.msra.mxu0 0
        %1216 = vmatprep.subr.bf16.mxu0 0
        %1217 = vmatpush2.bf16.xpose.msra.mxu0 0
        %1218 = vmatprep.mubr.bf16.mxu0 0
        %1219 = vmatmul.mubr.bf16.gmra.mxu0 %v1181
        %v1220 = vpop.f32.mrf.mxu0
        %v1221 = vadd.f32 0.0, %v1220
        %v1222 = vpop.f32.mrf.mxu0
        %v1223 = vpop.f32.mrf.mxu0
        %v1224 = vpop.f32.mrf.mxu0
        %1225 = vdwg.mxu0
        %1226 = vrot.lane.b32.xlu0 %v956, 112
        %v1227 = vpop.permute.xlu0 %1226
        %1228 = vrot.lane.b32.xlu0 %v956, 80
        %v1229 = vpop.permute.xlu0 %1228
        %v1231 = vsel %vm959, %v1227, 0
        %v1234 = vsel %vm959, %v1229, 0
        %1236 = vmatprep.subr.bf16.mxu0 0
        %1237 = vmatpush1.bf16.xpose.msra.mxu0 0
        %1238 = vmatprep.subr.bf16.mxu0 0
        %1239 = vmatpush1.bf16.xpose.msra.mxu0 0
        %1240 = vmatprep.subr.bf16.mxu0 0
        %1241 = vmatpush1.bf16.xpose.msra.mxu0 0
        %1242 = vmatprep.subr.bf16.mxu0 0
        %1243 = vmatpush1.bf16.xpose.msra.mxu0 0
        %1244 = vmatprep.subr.bf16.mxu0 0
        %1245 = vmatpush1.bf16.xpose.msra.mxu0 0
        %1246 = vmatprep.subr.bf16.mxu0 0
        %1247 = vmatpush1.bf16.xpose.msra.mxu0 0
        %1248 = vmatprep.subr.bf16.mxu0 0
        %1249 = vmatpush1.bf16.xpose.msra.mxu0 0
        %1250 = vmatprep.subr.bf16.mxu0 0
        %1251 = vmatpush1.bf16.xpose.msra.mxu0 %v1234
        %1252 = vmatprep.subr.bf16.mxu0 0
        %1253 = vmatpush2.bf16.xpose.msra.mxu0 0
        %1254 = vmatprep.subr.bf16.mxu0 0
        %1255 = vmatpush2.bf16.xpose.msra.mxu0 0
        %1256 = vmatprep.subr.bf16.mxu0 0
        %1257 = vmatpush2.bf16.xpose.msra.mxu0 0
        %1258 = vmatprep.subr.bf16.mxu0 0
        %1259 = vmatpush2.bf16.xpose.msra.mxu0 0
        %1260 = vmatprep.subr.bf16.mxu0 0
        %1261 = vmatpush2.bf16.xpose.msra.mxu0 0
        %1262 = vmatprep.subr.bf16.mxu0 0
        %1263 = vmatpush2.bf16.xpose.msra.mxu0 0
        %1264 = vmatprep.subr.bf16.mxu0 0
        %1265 = vmatpush2.bf16.xpose.msra.mxu0 0
        %1266 = vmatprep.subr.bf16.mxu0 0
        %1267 = vmatpush2.bf16.xpose.msra.mxu0 0
        %1268 = vmatprep.mubr.bf16.mxu0 0
        %1269 = vmatmul.mubr.bf16.gmra.mxu0 %v1231
        %v1270 = vpop.f32.mrf.mxu0
        %v1271 = vadd.f32 0.0, %v1270
        %v1272 = vpop.f32.mrf.mxu0
        %v1273 = vpop.f32.mrf.mxu0
        %v1274 = vpop.f32.mrf.mxu0
        %1275 = vdwg.mxu0
        %v1276 = vsel %vm1054, %v1221, -inf
        %1277 = vmax.xlane.f32.xlu0 %v1276
        %v1278 = vpop.xlane.xlu0 %1277
        %v1279 = vsel %vm1054, %v1271, -inf
        %1280 = vmax.xlane.f32.xlu0 %v1279
        %v1281 = vpop.xlane.xlu0 %1280
        %v1282 = vsub.f32 %v1221, %v1278
        %v1283 = vsub.f32 %v1271, %v1281
        %v1284 = vmul.f32 %v1282, 1.442695
        %v1285 = vpow.pop %v1284
        %v1286 = vmul.f32 %v1283, 1.442695
        %v1287 = vpow.pop %v1286
        %v1288 = vsel %vm1054, %v1285, 0.0
        %1289 = vadd.xlane.f32.xlu0 %v1288
        %v1290 = vpop.xlane.xlu0 %1289
        %v1291 = vsel %vm1054, %v1287, 0.0
        %1292 = vadd.xlane.f32.xlu0 %v1291
        %v1293 = vpop.xlane.xlu0 %1292
        %v1294 = vrcp.pop %v1290
        %v1295 = vrcp.pop %v1293
        %v1296 = vmul.f32 %v1285, %v1294
        %v1297 = vmul.f32 %v1287, %v1295
        %v1298 = vpack.c.bf16 %v1296, %v1296
        %v1299 = vpack.c.bf16 %v1297, %v1297
        %1300 = vrot.lane.b32.xlu0 %v955, 48
        %v1301 = vpop.permute.xlu0 %1300
        %v1303 = vsel %vm1054, %v1298, 0
        %v1306 = vsel %vm1084, %v1301, 0
        %1308 = vmatprep.subr.bf16.mxu0 0
        %1309 = vmatpush1.bf16.msra.mxu0 0
        %1310 = vmatprep.subr.bf16.mxu0 0
        %1311 = vmatpush1.bf16.msra.mxu0 0
        %1312 = vmatprep.subr.bf16.mxu0 0
        %1313 = vmatpush1.bf16.msra.mxu0 0
        %1314 = vmatprep.subr.bf16.mxu0 0
        %1315 = vmatpush1.bf16.msra.mxu0 0
        %1316 = vmatprep.subr.bf16.mxu0 0
        %1317 = vmatpush1.bf16.msra.mxu0 0
        %1318 = vmatprep.subr.bf16.mxu0 0
        %1319 = vmatpush1.bf16.msra.mxu0 0
        %1320 = vmatprep.subr.bf16.mxu0 0
        %1321 = vmatpush1.bf16.msra.mxu0 0
        %1322 = vmatprep.subr.bf16.mxu0 0
        %1323 = vmatpush1.bf16.msra.mxu0 %v1306
        %1324 = vmatprep.subr.bf16.mxu0 0
        %1325 = vmatpush2.bf16.msra.mxu0 0
        %1326 = vmatprep.subr.bf16.mxu0 0
        %1327 = vmatpush2.bf16.msra.mxu0 0
        %1328 = vmatprep.subr.bf16.mxu0 0
        %1329 = vmatpush2.bf16.msra.mxu0 0
        %1330 = vmatprep.subr.bf16.mxu0 0
        %1331 = vmatpush2.bf16.msra.mxu0 0
        %1332 = vmatprep.subr.bf16.mxu0 0
        %1333 = vmatpush2.bf16.msra.mxu0 0
        %1334 = vmatprep.subr.bf16.mxu0 0
        %1335 = vmatpush2.bf16.msra.mxu0 0
        %1336 = vmatprep.subr.bf16.mxu0 0
        %1337 = vmatpush2.bf16.msra.mxu0 0
        %1338 = vmatprep.subr.bf16.mxu0 0
        %1339 = vmatpush2.bf16.msra.mxu0 0
        %1340 = vmatprep.mubr.bf16.mxu0 0
        %1341 = vmatmul.mubr.bf16.gmra.mxu0 %v1303
        %v1342 = vpop.f32.mrf.mxu0
        %v1343 = vadd.f32 0.0, %v1342
        %v1344 = vpop.f32.mrf.mxu0
        %v1345 = vpop.f32.mrf.mxu0
        %v1346 = vpop.f32.mrf.mxu0
        %1347 = vdwg.mxu0
        %1348 = vrot.lane.b32.xlu0 %v956, 48
        %v1349 = vpop.permute.xlu0 %1348
        %v1351 = vsel %vm1054, %v1299, 0
        %v1354 = vsel %vm1084, %v1349, 0
        %1356 = vmatprep.subr.bf16.mxu0 0
        %1357 = vmatpush1.bf16.msra.mxu0 0
        %1358 = vmatprep.subr.bf16.mxu0 0
        %1359 = vmatpush1.bf16.msra.mxu0 0
        %1360 = vmatprep.subr.bf16.mxu0 0
        %1361 = vmatpush1.bf16.msra.mxu0 0
        %1362 = vmatprep.subr.bf16.mxu0 0
        %1363 = vmatpush1.bf16.msra.mxu0 0
        %1364 = vmatprep.subr.bf16.mxu0 0
        %1365 = vmatpush1.bf16.msra.mxu0 0
        %1366 = vmatprep.subr.bf16.mxu0 0
        %1367 = vmatpush1.bf16.msra.mxu0 0
        %1368 = vmatprep.subr.bf16.mxu0 0
        %1369 = vmatpush1.bf16.msra.mxu0 0
        %1370 = vmatprep.subr.bf16.mxu0 0
        %1371 = vmatpush1.bf16.msra.mxu0 %v1354
        %1372 = vmatprep.subr.bf16.mxu0 0
        %1373 = vmatpush2.bf16.msra.mxu0 0
        %1374 = vmatprep.subr.bf16.mxu0 0
        %1375 = vmatpush2.bf16.msra.mxu0 0
        %1376 = vmatprep.subr.bf16.mxu0 0
        %1377 = vmatpush2.bf16.msra.mxu0 0
        %1378 = vmatprep.subr.bf16.mxu0 0
        %1379 = vmatpush2.bf16.msra.mxu0 0
        %1380 = vmatprep.subr.bf16.mxu0 0
        %1381 = vmatpush2.bf16.msra.mxu0 0
        %1382 = vmatprep.subr.bf16.mxu0 0
        %1383 = vmatpush2.bf16.msra.mxu0 0
        %1384 = vmatprep.subr.bf16.mxu0 0
        %1385 = vmatpush2.bf16.msra.mxu0 0
        %1386 = vmatprep.subr.bf16.mxu0 0
        %1387 = vmatpush2.bf16.msra.mxu0 0
        %1388 = vmatprep.mubr.bf16.mxu0 0
        %1389 = vmatmul.mubr.bf16.gmra.mxu0 %v1351
        %v1390 = vpop.f32.mrf.mxu0
        %v1391 = vadd.f32 0.0, %v1390
        %v1392 = vpop.f32.mrf.mxu0
        %v1393 = vpop.f32.mrf.mxu0
        %v1394 = vpop.f32.mrf.mxu0
        %1395 = vdwg.mxu0
        %1398 = vrot.lane.b32.xlu0 %v1343, 16
        %v1399 = vpop.permute.xlu0 %1398
        %1400 = vrot.lane.b32.xlu0 %v1391, 16
        %v1401 = vpop.permute.xlu0 %1400
        %v1404 = vsel %vm959, %v1123, %v1399
        %v1405 = vsel %vm959, %v1171, %v1401
        %v1406 = vpack.c.bf16 %v1405, %v1404
        %v1407 = vld [vmem:[%s682] sm:$0xf]
        %v1408 = vld [vmem:[%s682 + $0x4] sm:$0xf]
        %v1409 = vld [vmem:[%s682 + $0x8] sm:$0xf]
        %v1410 = vld [vmem:[%s682 + $0xc] sm:$0xf]
        %v1411 = vld [vmem:[%s690] sm:$0x1]
        %v1413 = vlaneseq
        %v1414 = vshrl.u32 %v1413, 7
        %v1415 = vsub.s32 0, %v1414
        %v1416 = vrot.slane %v1411, %v1415
        %v1422 = vunpack.c.l.b16 %v1407
        %v1423 = vunpack.c.l.b16 %v1408
        %v1424 = vunpack.c.l.b16 %v1409
        %v1425 = vunpack.c.l.b16 %v1410
        %v1426 = vpack.c.b16 %v1423, %v1422
        %v1427 = vpack.c.b16 %v1425, %v1424
        %v1431 = vsel %vm906, %v1406, 0
        %1433 = vmatprep.subr.bf16.mxu0 0
        %1434 = vmatpush1.bf16.msra.mxu0 0
        %1435 = vmatprep.subr.bf16.mxu0 0
        %1436 = vmatpush1.bf16.msra.mxu0 0
        %1437 = vmatprep.subr.bf16.mxu0 0
        %1438 = vmatpush1.bf16.msra.mxu0 0
        %1439 = vmatprep.subr.bf16.mxu0 0
        %1440 = vmatpush1.bf16.msra.mxu0 0
        %1441 = vmatprep.subr.bf16.mxu0 0
        %1442 = vmatpush1.bf16.msra.mxu0 0
        %1443 = vmatprep.subr.bf16.mxu0 0
        %1444 = vmatpush1.bf16.msra.mxu0 0
        %1445 = vmatprep.subr.bf16.mxu0 0
        %1446 = vmatpush1.bf16.msra.mxu0 %v1427
        %1447 = vmatprep.subr.bf16.mxu0 0
        %1448 = vmatpush1.bf16.msra.mxu0 %v1426
        %1449 = vmatprep.subr.bf16.mxu0 0
        %1450 = vmatpush2.bf16.msra.mxu0 0
        %1451 = vmatprep.subr.bf16.mxu0 0
        %1452 = vmatpush2.bf16.msra.mxu0 0
        %1453 = vmatprep.subr.bf16.mxu0 0
        %1454 = vmatpush2.bf16.msra.mxu0 0
        %1455 = vmatprep.subr.bf16.mxu0 0
        %1456 = vmatpush2.bf16.msra.mxu0 0
        %1457 = vmatprep.subr.bf16.mxu0 0
        %1458 = vmatpush2.bf16.msra.mxu0 0
        %1459 = vmatprep.subr.bf16.mxu0 0
        %1460 = vmatpush2.bf16.msra.mxu0 0
        %1461 = vmatprep.subr.bf16.mxu0 0
        %1462 = vmatpush2.bf16.msra.mxu0 0
        %1463 = vmatprep.subr.bf16.mxu0 0
        %1464 = vmatpush2.bf16.msra.mxu0 0
        %1465 = vmatprep.mubr.bf16.mxu0 0
        %1466 = vmatmul.mubr.bf16.gmra.mxu0 %v1431
        %v1467 = vpop.f32.mrf.mxu0
        %v1468 = vadd.f32 %v1416, %v1467
        %v1469 = vpop.f32.mrf.mxu0
        %v1470 = vpop.f32.mrf.mxu0
        %v1471 = vadd.f32 %v1416, %v1470
        %v1472 = vpop.f32.mrf.mxu0
        %1473 = vdwg.mxu0
        %v1474 = vadd.f32 %v880, %v1468
        %v1475 = vadd.f32 %v881, %v1471
        %v1476 = vld [vmem:[%s715] sm:$0x1]
        %v1477 = vld [vmem:[%s723] sm:$0x1]
        %v1478 = vsel %vm906, %v1474, 0.0
        %1479 = vadd.xlane.f32.xlu0 %v1478
        %v1480 = vpop.xlane.xlu0 %1479
        %v1481 = vsel %vm906, %v1475, 0.0
        %1482 = vadd.xlane.f32.xlu0 %v1481
        %v1483 = vpop.xlane.xlu0 %1482
        %v1484 = vmul.f32 %v1480, 0.03125
        %v1485 = vmul.f32 %v1483, 0.03125
        %v1486 = vmul.f32 %v1474, %v1474
        %v1487 = vmul.f32 %v1475, %v1475
        %v1488 = vsel %vm906, %v1486, 0.0
        %1489 = vadd.xlane.f32.xlu0 %v1488
        %v1490 = vpop.xlane.xlu0 %1489
        %v1491 = vsel %vm906, %v1487, 0.0
        %1492 = vadd.xlane.f32.xlu0 %v1491
        %v1493 = vpop.xlane.xlu0 %1492
        %v1494 = vmul.f32 %v1490, 0.03125
        %v1495 = vmul.f32 %v1493, 0.03125
        %v1496 = vmul.f32 %v1484, %v1484
        %v1497 = vmul.f32 %v1485, %v1485
        %v1498 = vsub.f32 %v1494, %v1496
        %v1499 = vsub.f32 %v1495, %v1497
        %v1500 = vmax.f32 %v1498, 0.0
        %v1501 = vmax.f32 %v1499, 0.0
        %v1502 = vsub.f32 %v1474, %v1484
        %v1503 = vsub.f32 %v1475, %v1485
        %v1504 = vadd.f32 %v1500, 1e-05
        %v1505 = vadd.f32 %v1501, 1e-05
        %v1506 = vrsqrt.pop %v1504
        %v1507 = vrsqrt.pop %v1505
        %v1508 = vmul.f32 %v1502, %v1506
        %v1509 = vmul.f32 %v1503, %v1507
        %v1511 = vlaneseq
        %v1512 = vshrl.u32 %v1511, 7
        %v1513 = vsub.s32 0, %v1512
        %v1514 = vrot.slane %v1476, %v1513
        %v1516 = vmul.f32 %v1508, %v1514
        %v1517 = vmul.f32 %v1509, %v1514
        %v1519 = vlaneseq
        %v1520 = vshrl.u32 %v1519, 7
        %v1521 = vsub.s32 0, %v1520
        %v1522 = vrot.slane %v1477, %v1521
        %v1524 = vadd.f32 %v1516, %v1522
        %v1525 = vadd.f32 %v1517, %v1522
        %v1526 = vpack.c.bf16 %v1525, %v1524
        %v1527 = vld [vmem:[%s699] sm:$0xf]
        %v1528 = vld [vmem:[%s699 + $0x4] sm:$0xf]
        %v1529 = vld [vmem:[%s699 + $0x8] sm:$0xf]
        %v1530 = vld [vmem:[%s699 + $0xc] sm:$0xf]
        %v1531 = vld [vmem:[%s707] sm:$0x1]
        %v1533 = vlaneseq
        %v1534 = vshrl.u32 %v1533, 7
        %v1535 = vsub.s32 0, %v1534
        %v1536 = vrot.slane %v1531, %v1535
        %v1542 = vunpack.c.l.b16 %v1527
        %v1543 = vunpack.c.l.b16 %v1528
        %v1544 = vunpack.c.l.b16 %v1529
        %v1545 = vunpack.c.l.b16 %v1530
        %v1546 = vpack.c.b16 %v1543, %v1542
        %v1547 = vpack.c.b16 %v1545, %v1544
        %v1551 = vsel %vm906, %v1526, 0
        %1553 = vmatprep.subr.bf16.mxu0 0
        %1554 = vmatpush1.bf16.msra.mxu0 0
        %1555 = vmatprep.subr.bf16.mxu0 0
        %1556 = vmatpush1.bf16.msra.mxu0 0
        %1557 = vmatprep.subr.bf16.mxu0 0
        %1558 = vmatpush1.bf16.msra.mxu0 0
        %1559 = vmatprep.subr.bf16.mxu0 0
        %1560 = vmatpush1.bf16.msra.mxu0 0
        %1561 = vmatprep.subr.bf16.mxu0 0
        %1562 = vmatpush1.bf16.msra.mxu0 0
        %1563 = vmatprep.subr.bf16.mxu0 0
        %1564 = vmatpush1.bf16.msra.mxu0 0
        %1565 = vmatprep.subr.bf16.mxu0 0
        %1566 = vmatpush1.bf16.msra.mxu0 %v1547
        %1567 = vmatprep.subr.bf16.mxu0 0
        %1568 = vmatpush1.bf16.msra.mxu0 %v1546
        %1569 = vmatprep.subr.bf16.mxu0 0
        %1570 = vmatpush2.bf16.msra.mxu0 0
        %1571 = vmatprep.subr.bf16.mxu0 0
        %1572 = vmatpush2.bf16.msra.mxu0 0
        %1573 = vmatprep.subr.bf16.mxu0 0
        %1574 = vmatpush2.bf16.msra.mxu0 0
        %1575 = vmatprep.subr.bf16.mxu0 0
        %1576 = vmatpush2.bf16.msra.mxu0 0
        %1577 = vmatprep.subr.bf16.mxu0 0
        %1578 = vmatpush2.bf16.msra.mxu0 0
        %1579 = vmatprep.subr.bf16.mxu0 0
        %1580 = vmatpush2.bf16.msra.mxu0 0
        %1581 = vmatprep.subr.bf16.mxu0 0
        %1582 = vmatpush2.bf16.msra.mxu0 0
        %1583 = vmatprep.subr.bf16.mxu0 0
        %1584 = vmatpush2.bf16.msra.mxu0 0
        %1585 = vmatprep.mubr.bf16.mxu0 0
        %1586 = vmatmul.mubr.bf16.gmra.mxu0 %v1551
        %v1587 = vpop.f32.mrf.mxu0
        %v1588 = vadd.f32 %v1536, %v1587
        %v1589 = vpop.f32.mrf.mxu0
        %v1590 = vpop.f32.mrf.mxu0
        %v1591 = vadd.f32 %v1536, %v1590
        %v1592 = vpop.f32.mrf.mxu0
        %1593 = vdwg.mxu0
        %v1594 = vmax.f32 %v1588, 0.0
        %v1595 = vmax.f32 %v1591, 0.0
        %v1596 = vadd.f32 %v1524, %v1594
        %v1597 = vadd.f32 %v1525, %v1595
        %v1598 = vld [vmem:[%s805] sm:$0x1]
        %v1599 = vld [vmem:[%s808] sm:$0x1]
        %v1600 = vsel %vm906, %v1596, 0.0
        %1601 = vadd.xlane.f32.xlu0 %v1600
        %v1602 = vpop.xlane.xlu0 %1601
        %v1603 = vsel %vm906, %v1597, 0.0
        %1604 = vadd.xlane.f32.xlu0 %v1603
        %v1605 = vpop.xlane.xlu0 %1604
        %v1606 = vmul.f32 %v1602, 0.03125
        %v1607 = vmul.f32 %v1605, 0.03125
        %v1608 = vmul.f32 %v1596, %v1596
        %v1609 = vmul.f32 %v1597, %v1597
        %v1610 = vsel %vm906, %v1608, 0.0
        %1611 = vadd.xlane.f32.xlu0 %v1610
        %v1612 = vpop.xlane.xlu0 %1611
        %v1613 = vsel %vm906, %v1609, 0.0
        %1614 = vadd.xlane.f32.xlu0 %v1613
        %v1615 = vpop.xlane.xlu0 %1614
        %v1616 = vmul.f32 %v1612, 0.03125
        %v1617 = vmul.f32 %v1615, 0.03125
        %v1618 = vmul.f32 %v1606, %v1606
        %v1619 = vmul.f32 %v1607, %v1607
        %v1620 = vsub.f32 %v1616, %v1618
        %v1621 = vsub.f32 %v1617, %v1619
        %v1622 = vmax.f32 %v1620, 0.0
        %v1623 = vmax.f32 %v1621, 0.0
        %v1624 = vsub.f32 %v1596, %v1606
        %v1625 = vsub.f32 %v1597, %v1607
        %v1626 = vadd.f32 %v1622, 1e-05
        %v1627 = vadd.f32 %v1623, 1e-05
        %v1628 = vrsqrt.pop %v1626
        %v1629 = vrsqrt.pop %v1627
        %v1630 = vmul.f32 %v1624, %v1628
        %v1631 = vmul.f32 %v1625, %v1629
        %v1633 = vlaneseq
        %v1634 = vshrl.u32 %v1633, 7
        %v1635 = vsub.s32 0, %v1634
        %v1636 = vrot.slane %v1598, %v1635
        %v1638 = vmul.f32 %v1630, %v1636
        %v1639 = vmul.f32 %v1631, %v1636
        %v1641 = vlaneseq
        %v1642 = vshrl.u32 %v1641, 7
        %v1643 = vsub.s32 0, %v1642
        %v1644 = vrot.slane %v1599, %v1643
        %v1646 = vadd.f32 %v1638, %v1644
        %v1647 = vadd.f32 %v1639, %v1644
        %1648 = vst.msk [vmem:[#allocation2] sm:$0xff] %vm906, %v1646
        %1649 = vst.msk [vmem:[#allocation2 + $0x8] sm:$0xff] %vm906, %v1647
        %p1650 = scmp.eq.s32.totalorder %s41, 1
        // Predicated region
        $region125: #{tpu_custom_call.1} parent=83 // pred_check
          %p1651 = pneg %p1650
        $region126: #{tpu_custom_call.1} parent=83 // pred_check_branch
          %1653 = sbr.rel (%p1651) target = $region128
        $region127: #{tpu_custom_call.1} parent=83 // pred_region
          %v1654 = vsel %vm906, %v1646, -inf
          %v1655 = vrot.slane %v1654, 4
          %v1656 = vmax.f32 %v1654, %v1655
          %v1657 = vrot.slane %v1656, 2
          %v1658 = vmax.f32 %v1656, %v1657
          %v1659 = vrot.slane %v1658, 1
          %v1660 = vmax.f32 %v1658, %v1659
          %v1661 = vsel %vm906, %v1647, -inf
          %v1662 = vrot.slane %v1661, 4
          %v1663 = vmax.f32 %v1661, %v1662
          %v1664 = vrot.slane %v1663, 2
          %v1665 = vmax.f32 %v1663, %v1664
          %v1666 = vrot.slane %v1665, 1
          %v1667 = vmax.f32 %v1665, %v1666
          %v1668 = vpack.c.bf16 %v1660, %v1660
          %v1669 = vpack.c.bf16 %v1667, %v1667
          %v1670 = vld [vmem:[%s12] sm:$0xf]
          %v1671 = vld [vmem:[%s12 + $0x4] sm:$0xf]
          %v1672 = vld [vmem:[%s12 + $0x8] sm:$0xf]
          %v1673 = vld [vmem:[%s12 + $0xc] sm:$0xf]
          %v1674 = vld [vmem:[%s13] sm:$0x1]
          %v1676 = vlaneseq
          %v1677 = vshrl.u32 %v1676, 7
          %v1678 = vsub.s32 0, %v1677
          %v1679 = vrot.slane %v1674, %v1678
          %v1683 = vunpack.c.l.b16 %v1668
          %v1684 = vunpack.c.l.b16 %v1669
          %vm1685 = vcmask 1041409
          %v1686 = vsel %vm1685, %v1684, %v1683
          %v1687 = vpack.c.b16 %v1686, %v1686
          %v1692 = vunpack.c.l.b16 %v1670
          %v1693 = vunpack.c.l.b16 %v1671
          %v1694 = vunpack.c.l.b16 %v1672
          %v1695 = vunpack.c.l.b16 %v1673
          %v1696 = vpack.c.b16 %v1693, %v1692
          %v1697 = vpack.c.b16 %v1695, %v1694
          %v1701 = vsel %vm906, %v1687, 0
          %1703 = vmatprep.subr.bf16.mxu0 0
          %1704 = vmatpush1.bf16.msra.mxu0 0
          %1705 = vmatprep.subr.bf16.mxu0 0
          %1706 = vmatpush1.bf16.msra.mxu0 0
          %1707 = vmatprep.subr.bf16.mxu0 0
          %1708 = vmatpush1.bf16.msra.mxu0 0
          %1709 = vmatprep.subr.bf16.mxu0 0
          %1710 = vmatpush1.bf16.msra.mxu0 0
          %1711 = vmatprep.subr.bf16.mxu0 0
          %1712 = vmatpush1.bf16.msra.mxu0 0
          %1713 = vmatprep.subr.bf16.mxu0 0
          %1714 = vmatpush1.bf16.msra.mxu0 0
          %1715 = vmatprep.subr.bf16.mxu0 0
          %1716 = vmatpush1.bf16.msra.mxu0 %v1697
          %1717 = vmatprep.subr.bf16.mxu0 0
          %1718 = vmatpush1.bf16.msra.mxu0 %v1696
          %1719 = vmatprep.subr.bf16.mxu0 0
          %1720 = vmatpush2.bf16.msra.mxu0 0
          %1721 = vmatprep.subr.bf16.mxu0 0
          %1722 = vmatpush2.bf16.msra.mxu0 0
          %1723 = vmatprep.subr.bf16.mxu0 0
          %1724 = vmatpush2.bf16.msra.mxu0 0
          %1725 = vmatprep.subr.bf16.mxu0 0
          %1726 = vmatpush2.bf16.msra.mxu0 0
          %1727 = vmatprep.subr.bf16.mxu0 0
          %1728 = vmatpush2.bf16.msra.mxu0 0
          %1729 = vmatprep.subr.bf16.mxu0 0
          %1730 = vmatpush2.bf16.msra.mxu0 0
          %1731 = vmatprep.subr.bf16.mxu0 0
          %1732 = vmatpush2.bf16.msra.mxu0 0
          %1733 = vmatprep.subr.bf16.mxu0 0
          %1734 = vmatpush2.bf16.msra.mxu0 0
          %1735 = vmatprep.mubr.bf16.mxu0 0
          %1736 = vmatmul.mubr.bf16.gmra.mxu0 %v1701
          %v1737 = vpop.f32.mrf.mxu0
          %v1738 = vadd.f32 %v1679, %v1737
          %v1739 = vpop.f32.mrf.mxu0
          %v1740 = vpop.f32.mrf.mxu0
          %v1741 = vpop.f32.mrf.mxu0
          %1742 = vdwg.mxu0
          %v1743 = vmax.f32 %v1738, 0.0
          %v1744 = vpack.c.bf16 %v1743, %v1743
          %v1745 = vld [vmem:[%s14] sm:$0xf]
          %v1746 = vld [vmem:[%s14 + $0x4] sm:$0xf]
          %v1747 = vld [vmem:[%s14 + $0x8] sm:$0xf]
          %v1748 = vld [vmem:[%s14 + $0xc] sm:$0xf]
          %v1749 = vld [vmem:[%s15] sm:$0x1]
          %v1751 = vlaneseq
          %v1752 = vshrl.u32 %v1751, 7
          %v1753 = vsub.s32 0, %v1752
          %v1754 = vrot.slane %v1749, %v1753
          %v1760 = vunpack.c.l.b16 %v1745
          %v1761 = vunpack.c.l.b16 %v1746
          %v1762 = vunpack.c.l.b16 %v1747
          %v1763 = vunpack.c.l.b16 %v1748
          %v1764 = vpack.c.b16 %v1761, %v1760
          %v1765 = vpack.c.b16 %v1763, %v1762
          %v1769 = vsel %vm906, %v1744, 0
          %1771 = vmatprep.subr.bf16.mxu0 0
          %1772 = vmatpush1.bf16.msra.mxu0 0
          %1773 = vmatprep.subr.bf16.mxu0 0
          %1774 = vmatpush1.bf16.msra.mxu0 0
          %1775 = vmatprep.subr.bf16.mxu0 0
          %1776 = vmatpush1.bf16.msra.mxu0 0
          %1777 = vmatprep.subr.bf16.mxu0 0
          %1778 = vmatpush1.bf16.msra.mxu0 0
          %1779 = vmatprep.subr.bf16.mxu0 0
          %1780 = vmatpush1.bf16.msra.mxu0 0
          %1781 = vmatprep.subr.bf16.mxu0 0
          %1782 = vmatpush1.bf16.msra.mxu0 0
          %1783 = vmatprep.subr.bf16.mxu0 0
          %1784 = vmatpush1.bf16.msra.mxu0 %v1765
          %1785 = vmatprep.subr.bf16.mxu0 0
          %1786 = vmatpush1.bf16.msra.mxu0 %v1764
          %1787 = vmatprep.subr.bf16.mxu0 0
          %1788 = vmatpush2.bf16.msra.mxu0 0
          %1789 = vmatprep.subr.bf16.mxu0 0
          %1790 = vmatpush2.bf16.msra.mxu0 0
          %1791 = vmatprep.subr.bf16.mxu0 0
          %1792 = vmatpush2.bf16.msra.mxu0 0
          %1793 = vmatprep.subr.bf16.mxu0 0
          %1794 = vmatpush2.bf16.msra.mxu0 0
          %1795 = vmatprep.subr.bf16.mxu0 0
          %1796 = vmatpush2.bf16.msra.mxu0 0
          %1797 = vmatprep.subr.bf16.mxu0 0
          %1798 = vmatpush2.bf16.msra.mxu0 0
          %1799 = vmatprep.subr.bf16.mxu0 0
          %1800 = vmatpush2.bf16.msra.mxu0 0
          %1801 = vmatprep.subr.bf16.mxu0 0
          %1802 = vmatpush2.bf16.msra.mxu0 0
          %1803 = vmatprep.mubr.bf16.mxu0 0
          %1804 = vmatmul.mubr.bf16.gmra.mxu0 %v1769
          %v1805 = vpop.f32.mrf.mxu0
          %v1806 = vadd.f32 %v1754, %v1805
          %v1807 = vpop.f32.mrf.mxu0
          %v1808 = vpop.f32.mrf.mxu0
          %v1809 = vpop.f32.mrf.mxu0
          %1810 = vdwg.mxu0
          %vm1811 = vcmask 17408
          %1812 = vst.msk [vmem:[#allocation18] sm:$0x3] %vm1811, %v1806
        $region128: #{tpu_custom_call.1} parent=83 // pred_fallthru
          _
        // Predicated region
        $region129: #{tpu_custom_call.1} parent=83 // pred_check
          %p1813 = pneg %p440
        $region130: #{tpu_custom_call.1} parent=83 // pred_check_branch
          %1815 = sbr.rel (%p1813) target = $region132
        $region131: #{tpu_custom_call.1} parent=83 // pred_region
          %s1817 = ssub.s32 32, 32
          %1818 = vsyncadd [#allocation5], %s1817
          %s1820 = sshll.u32 [#allocation18], 4
          %s1821 = int_to_ptr.vmem [resolvable:$true] %s1820
          %1823 = dma.vmem_to_hbm [thread:$0]  %s1821, 32, %s16, [#allocation5]
        $region132: #{tpu_custom_call.1} parent=83 // pred_fallthru
          _
        // Predicated region
        $region133: #{tpu_custom_call.1} parent=83 // pred_check
          %p1824 = pneg %p440
        $region134: #{tpu_custom_call.1} parent=83 // pred_check_branch
          %1826 = sbr.rel (%p1824) target = $region136
        $region135: #{tpu_custom_call.1} parent=83 // pred_region
          %1827 = dma.done [#allocation5], 32
        $region136: #{tpu_custom_call.1} parent=83 // pred_fallthru
          _
      $region84: #{tpu_custom_call.1} parent=5 // pred_fallthru
        _
      %p1828 = scmp.le.s32.totalorder 2, %s36
      // Predicated region
      $region137: #{tpu_custom_call.1} parent=5 // pred_check
        %p1829 = pneg %p1828
      $region138: #{tpu_custom_call.1} parent=5 // pred_check_branch
        %1831 = sbr.rel (%p1829) target = $region140
      $region139: #{tpu_custom_call.1} parent=5 // pred_region
        %s1832 = ssub.s32 %s36, 2
      $region140: #{tpu_custom_call.1} parent=5 // pred_fallthru
        _
    $region6: #{tpu_custom_call.1} parent=1 // loop_footer
      %s40 = sadd.s32 1, %s36
    $region7: #{tpu_custom_call.1} parent=1 // loop_footer_branch
      %35 = sbr.rel target = $region3
    $region8: #{tpu_custom_call.1} parent=1 // loop_exit
      _
    %1833 = vsyncpa [#allocation4], 1
    %s1834 = scalar_lea.sflag [#allocation4], 1
    %1835 = vsyncpa %s1834, 1
    %1836 = vsyncpa [#allocation7], 1
    %s1837 = scalar_lea.sflag [#allocation7], 1
    %1838 = vsyncpa %s1837, 1
    %1839 = vsyncpa [#allocation10], 1
    %s1840 = scalar_lea.sflag [#allocation10], 1
    %1841 = vsyncpa %s1840, 1
    %1842 = vsyncpa [#allocation13], 1
    %s1843 = scalar_lea.sflag [#allocation13], 1
    %1844 = vsyncpa %s1843, 1
    %1845 = vsyncpa [#allocation16], 1
    %s1846 = scalar_lea.sflag [#allocation16], 1
    %1847 = vsyncpa %s1846, 1
    %1848 = vsyncpa [#allocation5], 1
    %s1849 = scalar_lea.sflag [#allocation5], 1
    %1850 = vsyncpa %s1849, 1

</llo_original>
